<compile_context>
chip_gen: v5e
topology: v5e:2x2
jax: 0.10.0
libtpu: 0.0.40
codegen_flags: <defaults>
</compile_context>

<pallas_src>
import math
import functools

import numpy as np
import jax
import jax.numpy as jnp
from jax.experimental import pallas as pl
from jax.experimental.pallas import tpu as pltpu


# ----------------------------------------------------------------------------
# Parameter construction (deterministic, mirrors the PyTorch / torchaudio init)
# ----------------------------------------------------------------------------
def hann_window_periodic(win_length: int) -> np.ndarray:
    n = np.arange(win_length, dtype=np.float64)
    return (0.5 - 0.5 * np.cos(2.0 * np.pi * n / win_length)).astype(np.float32)


def _hz_to_mel_slaney(hz):
    hz = np.asarray(hz, dtype=np.float64)
    f_sp = 200.0 / 3.0
    mel = hz / f_sp
    min_log_hz = 1000.0
    min_log_mel = min_log_hz / f_sp
    logstep = math.log(6.4) / 27.0
    log_region = hz >= min_log_hz
    mel = np.where(log_region,
                   min_log_mel + np.log(np.maximum(hz, 1e-10) / min_log_hz) / logstep,
                   mel)
    return mel


def _mel_to_hz_slaney(mel):
    mel = np.asarray(mel, dtype=np.float64)
    f_sp = 200.0 / 3.0
    hz = mel * f_sp
    min_log_hz = 1000.0
    min_log_mel = min_log_hz / f_sp
    logstep = math.log(6.4) / 27.0
    log_region = mel >= min_log_mel
    hz = np.where(log_region, min_log_hz * np.exp(logstep * (mel - min_log_mel)), hz)
    return hz


def melscale_fbanks(n_freqs, f_min, f_max, n_mels, sample_rate, norm="slaney", mel_scale="slaney"):
    """Reimplementation of torchaudio.functional.melscale_fbanks (slaney)."""
    all_freqs = np.linspace(0.0, sample_rate // 2, n_freqs)
    m_min = _hz_to_mel_slaney(f_min)
    m_max = _hz_to_mel_slaney(f_max)
    m_pts = np.linspace(m_min, m_max, n_mels + 2)
    f_pts = _mel_to_hz_slaney(m_pts)
    f_diff = f_pts[1:] - f_pts[:-1]                                # (n_mels + 1,)
    slopes = f_pts[None, :] - all_freqs[:, None]                   # (n_freqs, n_mels + 2)
    down_slopes = -slopes[:, :-2] / f_diff[:-1]                    # (n_freqs, n_mels)
    up_slopes = slopes[:, 2:] / f_diff[1:]                         # (n_freqs, n_mels)
    fb = np.maximum(0.0, np.minimum(down_slopes, up_slopes))
    if norm == "slaney":
        enorm = 2.0 / (f_pts[2:n_mels + 2] - f_pts[:n_mels])
        fb = fb * enorm[None, :]
    return fb.astype(np.float32)                                   # (n_freqs, n_mels)


def rfft_matrices_rows(n_fft: int):
    """cos / sin DFT matrices, orientation (n_stft, n_fft) [freq rows, time cols]."""
    k = np.arange(0, n_fft // 2 + 1, dtype=np.float64)[:, None]
    n = np.arange(0, n_fft, dtype=np.float64)[None, :]
    angle = -2.0 * np.pi * k * n / n_fft
    return np.cos(angle).astype(np.float32), np.sin(angle).astype(np.float32)


def _round_up(x, m):
    return ((x + m - 1) // m) * m


def _vmem_capacity_bytes() -> int:
    try:
        return int(pltpu.get_tpu_info().vmem_capacity_bytes)
    except Exception:
        return 64 * (1 << 20)            # conservative (v7x per-TC physical VMEM)


def _estimate_vmem_need(*, tm, hop, n_fft, nf_pad, nm_sub, cbytes, const_bufs=2):
    """Rough per-step VMEM footprint: pipelined IO + resident consts + live temps."""
    in_bytes = 2 * (hop * tm + hop * 128) * cbytes                 # main + tail, 2 buffers
    out_bytes = 2 * nm_sub * tm * 4                                # output, 2 buffers
    const_bytes = const_bufs * (2 * nf_pad * n_fft * cbytes + nm_sub * nf_pad * 4)
    tmp = (hop * (tm + 128) * cbytes                               # slab
           + n_fft * tm * cbytes                                   # frames_T
           + 2 * nf_pad * tm * 4                                   # spec
           + 3 * nf_pad * tm * 4)                                  # real/imag/p2/mag headroom
    return in_bytes + out_bytes + const_bytes + tmp


def _choose_tm(num_frames, *, n_fft, budget, need_fn):
    """Largest 128-multiple frame tile that fits the VMEM budget with bounded padding waste."""
    tm_needed = _round_up(max(num_frames, 1), 128)
    tm_cap = 2048 if n_fft <= 512 else 1024
    best = 128
    for t in sorted({128, 256, 512, 1024, 2048, tm_needed}):
        if t > tm_cap or need_fn(t) > budget:
            continue
        f_pad = _round_up(max(num_frames, 1), t)
        if f_pad - tm_needed > tm_needed // 4:                     # <= ~25% extra padding
            continue
        best = max(best, t)
    return best


# ----------------------------------------------------------------------------
# Pallas kernel: in-VMEM framing -> fused window-folded rDFT matmul ->
# magnitude -> f32 mel matmul, all in the "frame-on-lanes" layout.
# ----------------------------------------------------------------------------
def _mel_kernel(main_ref, tail_ref, wri_ref, fbt_ref, out_ref, *, nf_pad, n_fft, hop, power):
    tm = main_ref.shape[2]
    # Assemble the (n_fft, TM) frame matrix entirely in VMEM from the hop-strided
    # audio slab: frames_T[c*hop + r, f] = slab[r, f + c].  Only static
    # lane-offset slices + a sublane concat; the frame gather never hits HBM.
    slab = jnp.concatenate([main_ref[0], tail_ref[0]], axis=1)     # (hop, TM + 128)
    n_chunks = -(-n_fft // hop)
    pieces = []
    for c in range(n_chunks):
        h = min(hop, n_fft - c * hop)
        pieces.append(slab[:h, c:c + tm])
    frames_T = pieces[0] if len(pieces) == 1 else jnp.concatenate(pieces, axis=0)  # (n_fft, TM)

    # Fused, window-folded [cos; sin] DFT matmul (bf16 x bf16 -> f32 accumulate).
    # (For small n_fft this is HBM / per-step-overhead bound, not MXU bound.)
    spec = jnp.dot(wri_ref[...], frames_T, preferred_element_type=jnp.float32)     # (2*NF_PAD, TM)
    real = spec[:nf_pad, :]                                        # sublane-aligned (NF_PAD % 8 == 0)
    imag = spec[nf_pad:, :]
    p2 = real * real + imag * imag                                 # |X(k)|^2
    if power == 2.0:                                               # static python branch
        mag = p2
    elif power == 1.0:
        mag = jnp.sqrt(p2)
    else:
        mag = jnp.power(p2, 0.5 * power)

    # Mel projection stays in f32 (fb_T is f32, no cast of mag): (NM_SUB, NF_PAD) @ (NF_PAD, TM).
    out_ref[0] = jnp.dot(fbt_ref[...], mag, preferred_element_type=jnp.float32)


def mel_frames_pallas(audio_T, w_ri, fb_T, *, n_fft, hop, power, tm, f_pad, vmem_limit,
                      single_buffer_consts=True):
    """audio_T: (B, hop, G) hop-strided audio -> (B, NM_SUB, f_pad) f32 mel energies."""
    B, hop_dim, G = audio_T.shape
    two_nf, nfft_dim = w_ri.shape
    nf_pad = two_nf // 2
    nm_sub = fb_T.shape[0]
    assert f_pad % tm == 0 and tm % 128 == 0
    assert hop_dim == hop and nfft_dim == n_fft
    assert G >= f_pad + 128

    grid = (B, f_pad // tm)
    kernel = functools.partial(_mel_kernel, nf_pad=nf_pad, n_fft=n_fft, hop=hop,
                               power=float(power))

    # Resident constants: constant index map, so a single buffer suffices (saves
    # a full copy of w_ri under v7x's tighter VMEM).  Caller falls back if the
    # installed jax rejects pipeline_mode / Buffered(1).
    const_kw = {"pipeline_mode": pl.Buffered(1)} if single_buffer_consts else {}
    in_specs = [
        pl.BlockSpec((1, hop, tm), lambda b, j: (b, 0, j)),                       # main frame tile
        pl.BlockSpec((1, hop, 128), lambda b, j: (b, 0, (j + 1) * (tm // 128))),  # overlap tail
        pl.BlockSpec((two_nf, n_fft), lambda b, j: (0, 0), **const_kw),           # fused DFT (resident)
        pl.BlockSpec((nm_sub, nf_pad), lambda b, j: (0, 0), **const_kw),          # mel fbanks^T (resident)
    ]
    # TODO(synk): for very large n_fft (>= ~2048 on v7x) add a third "arbitrary"
    # grid axis over n_fft chunks with an f32 spec accumulator so w_ri / frames
    # need not be fully resident.
    return pl.pallas_call(
        kernel,
        out_shape=jax.ShapeDtypeStruct((B, nm_sub, f_pad), jnp.float32),
        grid_spec=pltpu.PrefetchScalarGridSpec(
            num_scalar_prefetch=0,
            grid=grid,
            in_specs=in_specs,
            out_specs=pl.BlockSpec((1, nm_sub, tm), lambda b, j: (b, 0, j)),
        ),
        compiler_params=pltpu.CompilerParams(
            dimension_semantics=("parallel", "parallel"),
            vmem_limit_bytes=int(vmem_limit),
        ),
    )(audio_T, audio_T, w_ri, fb_T)


# ----------------------------------------------------------------------------
# Full forward: padding / layout plumbing in plain JAX, hot path in Pallas.
# ----------------------------------------------------------------------------
class MelSpectrogramPallas:
    def __init__(self, mel_params: dict, use_bf16: bool = True):
        self.n_fft = mel_params["n_fft"]
        self.hop_length = mel_params.get("hop_length", self.n_fft // 4)
        self.win_length = mel_params.get("win_length", self.n_fft)
        self.sample_rate = mel_params["sample_rate"]
        self.center = mel_params.get("center", True)
        self.pad_mode = mel_params.get("pad_mode", "reflect")
        self.power = float(mel_params.get("power", 1.0))
        self.n_mels = mel_params["num_mels"]
        self.use_bf16 = use_bf16
        self._single_buffer_consts = True

        if self.win_length > self.n_fft:
            # torch.stft requires win_length <= n_fft
            raise ValueError(f"win_length ({self.win_length}) > n_fft ({self.n_fft})")

        n_stft = self.n_fft // 2 + 1
        f_min = mel_params.get("mel_fmin", 0.0)
        f_max = mel_params.get("mel_fmax")
        f_max = f_max if f_max is not None else self.sample_rate / 2.0

        # Hann window (periodic), centered-padded to n_fft like torch.stft.
        win = hann_window_periodic(self.win_length)
        win_full = np.zeros(self.n_fft, dtype=np.float32)
        left = (self.n_fft - self.win_length) // 2
        win_full[left:left + self.win_length] = win

        fb = melscale_fbanks(n_stft, f_min, f_max, self.n_mels, self.sample_rate,
                             norm=mel_params.get("norm", "slaney"),
                             mel_scale=mel_params.get("mel_scale", "slaney"))
        cos_m, sin_m = rfft_matrices_rows(self.n_fft)               # (n_stft, n_fft)

        # Fold the window into the DFT matrices (exact) and fuse real/imag into a
        # single (2*NF_PAD, n_fft) LHS.  NF_PAD only needs 8-alignment (sublane
        # slicing), not 128.
        NF_PAD = _round_up(n_stft, 8)
        NM_SUB = max(8, _round_up(self.n_mels, 8))
        self.NF_PAD, self.NM_SUB, self.n_stft = NF_PAD, NM_SUB, n_stft

        wr = cos_m * win_full[None, :]
        wi = sin_m * win_full[None, :]
        wr_p = np.pad(wr, ((0, NF_PAD - n_stft), (0, 0)))
        wi_p = np.pad(wi, ((0, NF_PAD - n_stft), (0, 0)))
        w_ri = np.concatenate([wr_p, wi_p], axis=0)                 # (2*NF_PAD, n_fft)
        fb_T = np.pad(fb.T, ((0, NM_SUB - self.n_mels), (0, NF_PAD - n_stft)))  # (NM_SUB, NF_PAD)

        cdt = jnp.bfloat16 if use_bf16 else jnp.float32
        self.w_ri = jnp.asarray(w_ri, dtype=cdt)                    # bf16 by default (DFT matmul)
        self.fb_T = jnp.asarray(fb_T, dtype=jnp.float32)            # mel matmul always f32

        # numpy copies for the pure-JAX reference
        self._win_full_np = win_full
        self._cos_np = cos_m
        self._sin_np = sin_m
        self._fb_np = fb

    def __call__(self, wav_with_channel: jnp.ndarray) -> jnp.ndarray:
        if wav_with_channel.ndim != 3 or wav_with_channel.shape[1] != 1:
            raise ValueError(f"Expected (B, 1, T_audio), got {wav_with_channel.shape}")
        wav = wav_with_channel[:, 0, :].astype(jnp.float32)         # (B, T)
        B, T = wav.shape

        if self.center:
            p = self.n_fft // 2
            if self.pad_mode == "reflect" and T <= p:
                raise ValueError("reflect padding requires T_audio > n_fft // 2")
            padded = jnp.pad(wav, ((0, 0), (p, p)), mode=self.pad_mode)
        else:
            padded = wav
        T_pad = padded.shape[1]

        if T_pad < self.n_fft:
            return jnp.zeros((B, self.n_mels, 0), dtype=jnp.float32)
        num_frames = (T_pad - self.n_fft) // self.hop_length + 1

        n_chunks = -(-self.n_fft // self.hop_length)
        if n_chunks - 1 > 128:
            # TODO(synk): support hop_length < n_fft/129 (needs a wider overlap tail block).
            raise ValueError("hop_length too small relative to n_fft for the in-kernel framing path")

        cap = _vmem_capacity_bytes()
        budget = int(0.60 * cap)
        cbytes = 2 if self.use_bf16 else 4
        need_fn = lambda t: _estimate_vmem_need(tm=t, hop=self.hop_length, n_fft=self.n_fft,
                                                nf_pad=self.NF_PAD, nm_sub=self.NM_SUB,
                                                cbytes=cbytes, const_bufs=2)
        tm = _choose_tm(num_frames, n_fft=self.n_fft, budget=budget, need_fn=need_fn)
        F_pad = _round_up(num_frames, tm)

        # Lay the audio out as (B, hop, G): lane axis = frame-start index, sublane
        # axis = intra-hop offset.  One cheap reshape+transpose of the (already
        # bf16) audio; the kernel then reads the audio essentially once instead of
        # re-reading a 4x-expanded frame gather.
        G = F_pad + 128                      # +128 lanes so the overlap tail block stays in bounds
        T_need = G * self.hop_length
        cdt = jnp.bfloat16 if self.use_bf16 else jnp.float32
        padded = jnp.pad(padded, ((0, 0), (0, T_need - T_pad)))
        audio_T = padded.astype(cdt).reshape(B, G, self.hop_length).transpose(0, 2, 1)  # (B, hop, G)

        need = need_fn(tm)
        vmem_limit = min(int(0.72 * cap), max(32 << 20, int(1.5 * need), need))

        kwargs = dict(n_fft=self.n_fft, hop=self.hop_length, power=self.power,
                      tm=tm, f_pad=F_pad, vmem_limit=vmem_limit)
        try:
            out = mel_frames_pallas(audio_T, self.w_ri, self.fb_T,
                                    single_buffer_consts=self._single_buffer_consts, **kwargs)
        except Exception:
            if not self._single_buffer_consts:
                raise
            # pl.Buffered(1) not accepted by this jax version -> default double buffering.
            self._single_buffer_consts = False
            out = mel_frames_pallas(audio_T, self.w_ri, self.fb_T,
                                    single_buffer_consts=False, **kwargs)
        return out[:, : self.n_mels, :num_frames]                   # (B, n_mels, num_frames)


# ----------------------------------------------------------------------------
# Pure-JAX reference (mirrors the PyTorch mel front end) for correctness checks
# ----------------------------------------------------------------------------
def reference_forward(model: MelSpectrogramPallas, wav_with_channel):
    hi = jax.lax.Precision.HIGHEST
    wav = wav_with_channel[:, 0, :].astype(jnp.float32)
    if model.center:
        p = model.n_fft // 2
        padded = jnp.pad(wav, ((0, 0), (p, p)), mode=model.pad_mode)
    else:
        padded = wav
    num_frames = (padded.shape[1] - model.n_fft) // model.hop_length + 1
    starts = np.arange(num_frames) * model.hop_length
    idx = starts[:, None] + np.arange(model.n_fft)[None, :]         # (F, n_fft)
    frames = padded[:, idx] * jnp.asarray(model._win_full_np)[None, None, :]     # (B, F, n_fft)
    real = jnp.einsum('bfn,kn->bfk', frames, jnp.asarray(model._cos_np), precision=hi)
    imag = jnp.einsum('bfn,kn->bfk', frames, jnp.asarray(model._sin_np), precision=hi)
    mag = jnp.sqrt(real ** 2 + imag ** 2)
    if model.power != 1.0:
        mag = mag ** model.power
    return jnp.einsum('bfk,km->bmf', mag, jnp.asarray(model._fb_np), precision=hi)  # (B, n_mels, F)


if __name__ == "__main__":
    mel_params = {
        "n_fft": 128,
        "hop_length": 32,
        "win_length": 128,
        "sample_rate": 16000,
        "num_mels": 16,
        "mel_fmin": 0.0,
        "mel_fmax": None,
        "center": True,
        "pad_mode": "reflect",
        "power": 1.0,
        "norm": "slaney",
        "mel_scale": "slaney",
        "window_fn": "hann_window",
    }

    key = jax.random.PRNGKey(0)
    B, T_audio = 2, 256
    wav = jax.random.normal(key, (B, 1, T_audio), dtype=jnp.float32)

    expected_frames = (T_audio + 2 * (mel_params["n_fft"] // 2)
                       - mel_params["n_fft"]) // mel_params["hop_length"] + 1

    # f32 path: exact-math check of the in-kernel framing + fused DFT / mel matmuls.
    model_f32 = MelSpectrogramPallas(mel_params, use_bf16=False)
    out_f32 = jax.block_until_ready(model_f32(wav))
    ref = np.asarray(jax.block_until_ready(reference_forward(model_f32, wav)))
    assert out_f32.shape == (B, mel_params["num_mels"], expected_frames), out_f32.shape
    np.testing.assert_allclose(np.asarray(out_f32), ref, rtol=2e-4, atol=2e-4)

    # Default path (bf16 DFT matmul, f32 mel matmul): relaxed tolerance for bf16 inputs.
    model = MelSpectrogramPallas(mel_params)                        # use_bf16=True by default
    out_bf16 = jax.block_until_ready(model(wav))
    assert out_bf16.shape == (B, mel_params["num_mels"], expected_frames), out_bf16.shape
    atol_bf16 = 2e-2 * float(np.max(np.abs(ref)))
    np.testing.assert_allclose(np.asarray(out_bf16), ref, rtol=5e-2, atol=atol_bf16)

    print("KERNEL_OK")
</pallas_src>

<mosaic_0001>
module attributes {stable_mosaic.version = 11 : i64} {
  func.func @_mel_kernel(%arg0: i32, %arg1: i32, %arg2: memref<1x32x128xf32, #tpu.memory_space<vmem>>, %arg3: memref<1x32x128xf32, #tpu.memory_space<vmem>>, %arg4: memref<144x128xf32, #tpu.memory_space<vmem>>, %arg5: memref<16x72xf32, #tpu.memory_space<vmem>>, %arg6: memref<1x16x128xf32, #tpu.memory_space<vmem>>) attributes {dimension_semantics = [#tpu.dimension_semantics<parallel>, #tpu.dimension_semantics<parallel>], iteration_bounds = array<i64: 2, 1>, scalar_prefetch = 0 : i64, scratch_operands = 0 : i64, tpu.core_type = #tpu.core_type<tc>, window_params = [{transform_indices = @transform_0, window_bounds = array<i64: 1, 32, 128>}, {transform_indices = @transform_1, window_bounds = array<i64: 1, 32, 128>}, {pipeline_mode = #tpu.pipeline_mode<synchronous>, transform_indices = @transform_2, window_bounds = array<i64: 144, 128>}, {pipeline_mode = #tpu.pipeline_mode<synchronous>, transform_indices = @transform_3, window_bounds = array<i64: 16, 72>}, {transform_indices = @transform_4, window_bounds = array<i64: 1, 16, 128>}]} {
    %c0 = arith.constant 0 : index
    %c0_0 = arith.constant 0 : index
    %c0_1 = arith.constant 0 : index
    %0 = vector.load %arg2[%c0, %c0_0, %c0_1] : memref<1x32x128xf32, #tpu.memory_space<vmem>>, vector<1x32x128xf32>
    %1 = vector.shape_cast %0 : vector<1x32x128xf32> to vector<32x128xf32>
    %c0_2 = arith.constant 0 : index
    %c0_3 = arith.constant 0 : index
    %c0_4 = arith.constant 0 : index
    %2 = vector.load %arg3[%c0_2, %c0_3, %c0_4] : memref<1x32x128xf32, #tpu.memory_space<vmem>>, vector<1x32x128xf32>
    %3 = vector.shape_cast %2 : vector<1x32x128xf32> to vector<32x128xf32>
    %4 = tpu.concatenate %1, %3 in 1 : vector<32x128xf32>, vector<32x128xf32> -> vector<32x256xf32>
    %5 = vector.extract_strided_slice %4 {offsets = [0, 0], sizes = [32, 128], strides = [1, 1]} : vector<32x256xf32> to vector<32x128xf32>
    %6 = vector.extract_strided_slice %4 {offsets = [0, 1], sizes = [32, 128], strides = [1, 1]} : vector<32x256xf32> to vector<32x128xf32>
    %7 = vector.extract_strided_slice %4 {offsets = [0, 2], sizes = [32, 128], strides = [1, 1]} : vector<32x256xf32> to vector<32x128xf32>
    %8 = vector.extract_strided_slice %4 {offsets = [0, 3], sizes = [32, 128], strides = [1, 1]} : vector<32x256xf32> to vector<32x128xf32>
    %9 = tpu.concatenate %5, %6, %7, %8 in 0 : vector<32x128xf32>, vector<32x128xf32>, vector<32x128xf32>, vector<32x128xf32> -> vector<128x128xf32>
    %c0_5 = arith.constant 0 : index
    %c0_6 = arith.constant 0 : index
    %10 = vector.load %arg4[%c0_5, %c0_6] : memref<144x128xf32, #tpu.memory_space<vmem>>, vector<144x128xf32>
    %cst = arith.constant dense<0.000000e+00> : vector<144x128xf32>
    %11 = tpu.matmul %10, %9, %cst {dimension_numbers = #tpu.dot_dimension_numbers<[1], [0], [0], [1], [0, 0, 1, 1], [], []>} : vector<144x128xf32>, vector<128x128xf32>, vector<144x128xf32> -> vector<144x128xf32>
    %12 = vector.extract_strided_slice %11 {offsets = [0, 0], sizes = [72, 128], strides = [1, 1]} : vector<144x128xf32> to vector<72x128xf32>
    %13 = vector.extract_strided_slice %11 {offsets = [72, 0], sizes = [72, 128], strides = [1, 1]} : vector<144x128xf32> to vector<72x128xf32>
    %14 = arith.mulf %12, %12 : vector<72x128xf32>
    %15 = arith.mulf %13, %13 : vector<72x128xf32>
    %16 = arith.addf %14, %15 : vector<72x128xf32>
    %17 = math.sqrt %16 : vector<72x128xf32>
    %c0_7 = arith.constant 0 : index
    %c0_8 = arith.constant 0 : index
    %18 = vector.load %arg5[%c0_7, %c0_8] : memref<16x72xf32, #tpu.memory_space<vmem>>, vector<16x72xf32>
    %cst_9 = arith.constant dense<0.000000e+00> : vector<16x128xf32>
    %19 = tpu.matmul %18, %17, %cst_9 {dimension_numbers = #tpu.dot_dimension_numbers<[1], [0], [0], [1], [0, 0, 1, 1], [], []>} : vector<16x72xf32>, vector<72x128xf32>, vector<16x128xf32> -> vector<16x128xf32>
    %c0_10 = arith.constant 0 : index
    %c0_11 = arith.constant 0 : index
    %c0_12 = arith.constant 0 : index
    %20 = vector.load %arg6[%c0_10, %c0_11, %c0_12] : memref<1x16x128xf32, #tpu.memory_space<vmem>>, vector<1x16x128xf32>
    %21 = vector.shape_cast %20 : vector<1x16x128xf32> to vector<16x128xf32>
    %22 = vector.shape_cast %19 : vector<16x128xf32> to vector<1x16x128xf32>
    tpu.vector_store %arg6[%c0_10, %c0_11, %c0_12], %22 {strides = array<i32>} : memref<1x16x128xf32, #tpu.memory_space<vmem>>, vector<1x16x128xf32>,
    return
  }
  func.func @transform_0(%arg0: i32, %arg1: i32) -> (i32, i32, i32) {
    %c0_i32 = arith.constant 0 : i32
    %c0_i32_0 = arith.constant 0 : i32
    return %arg0, %c0_i32, %arg1 : i32, i32, i32
  }
  func.func @transform_1(%arg0: i32, %arg1: i32) -> (i32, i32, i32) {
    %c1_i32 = arith.constant 1 : i32
    %0 = arith.addi %arg1, %c1_i32 : i32
    %c1_i32_0 = arith.constant 1 : i32
    %1 = arith.muli %0, %c1_i32_0 : i32
    %c0_i32 = arith.constant 0 : i32
    %c0_i32_1 = arith.constant 0 : i32
    return %arg0, %c0_i32, %1 : i32, i32, i32
  }
  func.func @transform_2(%arg0: i32, %arg1: i32) -> (i32, i32) {
    %c0_i32 = arith.constant 0 : i32
    %c0_i32_0 = arith.constant 0 : i32
    %c0_i32_1 = arith.constant 0 : i32
    return %c0_i32, %c0_i32_0 : i32, i32
  }
  func.func @transform_3(%arg0: i32, %arg1: i32) -> (i32, i32) {
    %c0_i32 = arith.constant 0 : i32
    %c0_i32_0 = arith.constant 0 : i32
    %c0_i32_1 = arith.constant 0 : i32
    return %c0_i32, %c0_i32_0 : i32, i32
  }
  func.func @transform_4(%arg0: i32, %arg1: i32) -> (i32, i32, i32) {
    %c0_i32 = arith.constant 0 : i32
    %c0_i32_0 = arith.constant 0 : i32
    return %arg0, %c0_i32, %arg1 : i32, i32, i32
  }
}

module attributes {stable_mosaic.version = 11 : i64} {
  func.func @_mel_kernel(%arg0: i32, %arg1: i32, %arg2: memref<1x32x128xf32, #tpu.memory_space<vmem>>, %arg3: memref<1x32x128xf32, #tpu.memory_space<vmem>>, %arg4: memref<144x128xf32, #tpu.memory_space<vmem>>, %arg5: memref<16x72xf32, #tpu.memory_space<vmem>>, %arg6: memref<1x16x128xf32, #tpu.memory_space<vmem>>) attributes {dimension_semantics = [#tpu.dimension_semantics<parallel>, #tpu.dimension_semantics<parallel>], iteration_bounds = array<i64: 2, 1>, scalar_prefetch = 0 : i64, scratch_operands = 0 : i64, tpu.core_type = #tpu.core_type<tc>, window_params = [{transform_indices = @transform_0, window_bounds = array<i64: 1, 32, 128>}, {transform_indices = @transform_1, window_bounds = array<i64: 1, 32, 128>}, {pipeline_mode = #tpu.pipeline_mode<synchronous>, transform_indices = @transform_2, window_bounds = array<i64: 144, 128>}, {pipeline_mode = #tpu.pipeline_mode<synchronous>, transform_indices = @transform_3, window_bounds = array<i64: 16, 72>}, {transform_indices = @transform_4, window_bounds = array<i64: 1, 16, 128>}]} {
    %c0 = arith.constant 0 : index
    %c0_0 = arith.constant 0 : index
    %c0_1 = arith.constant 0 : index
    %0 = vector.load %arg2[%c0, %c0_0, %c0_1] : memref<1x32x128xf32, #tpu.memory_space<vmem>>, vector<1x32x128xf32>
    %1 = vector.shape_cast %0 : vector<1x32x128xf32> to vector<32x128xf32>
    %c0_2 = arith.constant 0 : index
    %c0_3 = arith.constant 0 : index
    %c0_4 = arith.constant 0 : index
    %2 = vector.load %arg3[%c0_2, %c0_3, %c0_4] : memref<1x32x128xf32, #tpu.memory_space<vmem>>, vector<1x32x128xf32>
    %3 = vector.shape_cast %2 : vector<1x32x128xf32> to vector<32x128xf32>
    %4 = tpu.concatenate %1, %3 in 1 : vector<32x128xf32>, vector<32x128xf32> -> vector<32x256xf32>
    %5 = vector.extract_strided_slice %4 {offsets = [0, 0], sizes = [32, 128], strides = [1, 1]} : vector<32x256xf32> to vector<32x128xf32>
    %6 = vector.extract_strided_slice %4 {offsets = [0, 1], sizes = [32, 128], strides = [1, 1]} : vector<32x256xf32> to vector<32x128xf32>
    %7 = vector.extract_strided_slice %4 {offsets = [0, 2], sizes = [32, 128], strides = [1, 1]} : vector<32x256xf32> to vector<32x128xf32>
    %8 = vector.extract_strided_slice %4 {offsets = [0, 3], sizes = [32, 128], strides = [1, 1]} : vector<32x256xf32> to vector<32x128xf32>
    %9 = tpu.concatenate %5, %6, %7, %8 in 0 : vector<32x128xf32>, vector<32x128xf32>, vector<32x128xf32>, vector<32x128xf32> -> vector<128x128xf32>
    %c0_5 = arith.constant 0 : index
    %c0_6 = arith.constant 0 : index
    %10 = vector.load %arg4[%c0_5, %c0_6] : memref<144x128xf32, #tpu.memory_space<vmem>>, vector<144x128xf32>
    %cst = arith.constant dense<0.000000e+00> : vector<144x128xf32>
    %11 = tpu.matmul %10, %9, %cst {dimension_numbers = #tpu.dot_dimension_numbers<[1], [0], [0], [1], [0, 0, 1, 1], [], []>} : vector<144x128xf32>, vector<128x128xf32>, vector<144x128xf32> -> vector<144x128xf32>
    %12 = vector.extract_strided_slice %11 {offsets = [0, 0], sizes = [72, 128], strides = [1, 1]} : vector<144x128xf32> to vector<72x128xf32>
    %13 = vector.extract_strided_slice %11 {offsets = [72, 0], sizes = [72, 128], strides = [1, 1]} : vector<144x128xf32> to vector<72x128xf32>
    %14 = arith.mulf %12, %12 : vector<72x128xf32>
    %15 = arith.mulf %13, %13 : vector<72x128xf32>
    %16 = arith.addf %14, %15 : vector<72x128xf32>
    %17 = math.sqrt %16 : vector<72x128xf32>
    %c0_7 = arith.constant 0 : index
    %c0_8 = arith.constant 0 : index
    %18 = vector.load %arg5[%c0_7, %c0_8] : memref<16x72xf32, #tpu.memory_space<vmem>>, vector<16x72xf32>
    %cst_9 = arith.constant dense<0.000000e+00> : vector<16x128xf32>
    %19 = tpu.matmul %18, %17, %cst_9 {dimension_numbers = #tpu.dot_dimension_numbers<[1], [0], [0], [1], [0, 0, 1, 1], [], []>} : vector<16x72xf32>, vector<72x128xf32>, vector<16x128xf32> -> vector<16x128xf32>
    %c0_10 = arith.constant 0 : index
    %c0_11 = arith.constant 0 : index
    %c0_12 = arith.constant 0 : index
    %20 = vector.load %arg6[%c0_10, %c0_11, %c0_12] : memref<1x16x128xf32, #tpu.memory_space<vmem>>, vector<1x16x128xf32>
    %21 = vector.shape_cast %20 : vector<1x16x128xf32> to vector<16x128xf32>
    %22 = vector.shape_cast %19 : vector<16x128xf32> to vector<1x16x128xf32>
    tpu.vector_store %arg6[%c0_10, %c0_11, %c0_12], %22 {strides = array<i32>} : memref<1x16x128xf32, #tpu.memory_space<vmem>>, vector<1x16x128xf32>,
    return
  }
  func.func @transform_0(%arg0: i32, %arg1: i32) -> (i32, i32, i32) {
    %c0_i32 = arith.constant 0 : i32
    %c0_i32_0 = arith.constant 0 : i32
    return %arg0, %c0_i32, %arg1 : i32, i32, i32
  }
  func.func @transform_1(%arg0: i32, %arg1: i32) -> (i32, i32, i32) {
    %c1_i32 = arith.constant 1 : i32
    %0 = arith.addi %arg1, %c1_i32 : i32
    %c1_i32_0 = arith.constant 1 : i32
    %1 = arith.muli %0, %c1_i32_0 : i32
    %c0_i32 = arith.constant 0 : i32
    %c0_i32_1 = arith.constant 0 : i32
    return %arg0, %c0_i32, %1 : i32, i32, i32
  }
  func.func @transform_2(%arg0: i32, %arg1: i32) -> (i32, i32) {
    %c0_i32 = arith.constant 0 : i32
    %c0_i32_0 = arith.constant 0 : i32
    %c0_i32_1 = arith.constant 0 : i32
    return %c0_i32, %c0_i32_0 : i32, i32
  }
  func.func @transform_3(%arg0: i32, %arg1: i32) -> (i32, i32) {
    %c0_i32 = arith.constant 0 : i32
    %c0_i32_0 = arith.constant 0 : i32
    %c0_i32_1 = arith.constant 0 : i32
    return %c0_i32, %c0_i32_0 : i32, i32
  }
  func.func @transform_4(%arg0: i32, %arg1: i32) -> (i32, i32, i32) {
    %c0_i32 = arith.constant 0 : i32
    %c0_i32_0 = arith.constant 0 : i32
    return %arg0, %c0_i32, %arg1 : i32, i32, i32
  }
}

</mosaic_0001>

<llo_original>
// kernel: tpu_custom_call.1
$region0: #{tpu_custom_call.1}
  #allocation0 [shape = 'u32[]', space=smem, size = 0x4, offset = 0x4, fixed_abs, tag = 'smem constant byte address 0x4 - core index']
  #allocation1 [shape = 'u32[72,128]{1,0:T(1,128)}', space=vmem, size = 0x9000, scoped, tag = 'internal scratch']
  %s0 = inlined_call_operand.hbm [shape: f32[2,32,256], index: 0, kind: input, shape index: {}]
  %s1 = inlined_call_operand.hbm [shape: f32[2,32,256], index: 1, kind: input, shape index: {}]
  %s2 = inlined_call_operand.hbm [shape: f32[144,128], index: 2, kind: input, shape index: {}]
  %s3 = inlined_call_operand.hbm [shape: f32[16,72], index: 3, kind: input, shape index: {}]
  %s4 = inlined_call_operand.hbm [shape: f32[2,16,128], index: 4, kind: output, shape index: {}]
  %s5 = sld [smem:[#allocation0]]
  $region65: #{tpu_custom_call.1} parent=0
    _
  %s7 = ssub.s32 1, %s5
  %s8 = scalar_select 0, %s7, %s5
  $region1: #{tpu_custom_call.1} parent=0
    #allocation2 [shape = 'u8[32768]{0}', space=vmem, size = 0x8000, scoped, tag = 'input window, operand 0']
    #allocation3 [shape = 's32[2]{0}', space=sflag, size = 0x8, scoped, tag = 'scoped memory for tpu_custom_call.1']
    #allocation4 [shape = 's32[2]{0}', space=sflag, size = 0x8, scoped, tag = 'scoped memory for tpu_custom_call.1']
    #allocation5 [shape = 'u8[32768]{0}', space=vmem, size = 0x8000, scoped, tag = 'input window, operand 1']
    #allocation6 [shape = 's32[2]{0}', space=sflag, size = 0x8, scoped, tag = 'scoped memory for tpu_custom_call.1']
    #allocation7 [shape = 'u8[73728]{0}', space=vmem, size = 0x12000, scoped, tag = 'input window, operand 2, single buffered']
    #allocation8 [shape = 'u8[8192]{0}', space=vmem, size = 0x2000, scoped, tag = 'input window, operand 3, single buffered']
    #allocation9 [shape = 's32[1]{0}', space=sflag, size = 0x4, scoped, tag = 'scoped memory for tpu_custom_call.1']
    #allocation10 [shape = 'u8[16384]{0}', space=vmem, size = 0x4000, scoped, tag = 'output window, operand 0']
    %9 = vsyncpa [#allocation3], 0
    %s10 = scalar_lea.sflag [#allocation3], 1
    %11 = vsyncpa %s10, 0
    %12 = vsyncpa [#allocation6], 0
    %s13 = scalar_lea.sflag [#allocation6], 1
    %14 = vsyncpa %s13, 0
    %15 = vsyncpa [#allocation9], 0
    %16 = vsyncpa [#allocation4], 0
    %s17 = scalar_lea.sflag [#allocation4], 1
    %18 = vsyncpa %s17, 0
    loop: start=0, step=1, limit=4
    $region2: #{tpu_custom_call.1} parent=1 // loop_pre_header
      _
    $region3: #{tpu_custom_call.1} parent=1 // loop_header
      %s20 = sphi 0, %s24
      %p21 = scmp.ge.s32.totalorder %s20, 4
      %s27 = sphi 0, %s39
      %s28 = sphi 0, %s35
      %s29 = sphi 0, %s27
      %s30 = sphi 0, %s28
      %s31 = sphi 0, %s29
      %s32 = sphi 0, %s30
      %s44 = sphi 0, %s46
      %s47 = sphi 0, %s44
      %s48 = sphi 0, %s47
      %s64 = sphi 0, %s48
      %s74 = sphi 0, %s76
      %s77 = sphi 0, %s74
      %s78 = sphi 0, %s77
      %s94 = sphi 0, %s78
      %s98 = sphi 0, %s98
      %s100 = sphi 0, %s98
      %s101 = sphi 0, %s100
      %s115 = sphi 0, %s101
      %s119 = sphi 0, %s119
      %s121 = sphi 0, %s119
      %s122 = sphi 0, %s121
      %s136 = sphi 0, %s122
      %s144 = sphi 0, %s146
      %s147 = sphi 0, %s144
      %s148 = sphi 0, %s147
      %s164 = sphi 0, %s148
    $region4: #{tpu_custom_call.1} parent=1 // loop_header_branch
      %23 = sbr.rel (%p21) target = $region8
    $region5: #{tpu_custom_call.1} parent=1 // loop_body
      %s25 = ssub.s32 %s20, 1
      %s26 = ssub.s32 %s20, 2
      %s33 = sadd.s32 1, %s28
      %p34 = scmp.ge.s32.totalorder %s33, 1
      %s35 = scalar_select %p34, 0, %s33
      %s36 = sadd.s32 1, %s27
      %s37 = scalar_select %p34, %s36, %s27
      %p38 = scmp.ge.s32.totalorder %s37, 2
      %s39 = scalar_select %p38, 0, %s37
      %s40 = ssub.s32 %s27, %s39
      %s41 = ssub.s32 %s28, %s35
      %s42 = sor.u32 %s40, %s41
      %p43 = scmp.eq.s32.totalorder %s42, 0
      %s45 = sadd.s32 %s44, 1
      %s46 = scalar_select %p43, %s44, %s45
      %p49 = pneg %p43
      %p50 = scmp.eq.s32.totalorder %s20, 1
      %p51 = por %p49, %p50
      %p52 = scmp.ne.s32.totalorder %s44, %s47
      %p53 = scmp.eq.s32.totalorder %s20, 0
      %p54 = por %p52, %p53
      %p55 = scmp.ne.s32.totalorder %s44, %s47
      %p56 = scmp.eq.s32.totalorder %s25, 1
      %p57 = por %p55, %p56
      %p58 = scmp.ne.s32.totalorder %s47, %s48
      %p59 = scmp.eq.s32.totalorder %s25, 0
      %p60 = por %p58, %p59
      %p61 = scmp.ne.s32.totalorder %s47, %s48
      %p62 = scmp.eq.s32.totalorder %s26, 1
      %p63 = por %p61, %p62
      %p65 = scmp.ne.s32.totalorder %s48, %s64
      %p66 = scmp.eq.s32.totalorder %s26, 0
      %p67 = por %p65, %p66
      %s68 = sadd.s32 %s28, 1
      %s69 = sadd.s32 %s35, 1
      %s70 = ssub.s32 %s27, %s39
      %s71 = ssub.s32 %s68, %s69
      %s72 = sor.u32 %s70, %s71
      %p73 = scmp.eq.s32.totalorder %s72, 0
      %s75 = sadd.s32 %s74, 1
      %s76 = scalar_select %p73, %s74, %s75
      %p79 = pneg %p73
      %p80 = scmp.eq.s32.totalorder %s20, 1
      %p81 = por %p79, %p80
      %p82 = scmp.ne.s32.totalorder %s74, %s77
      %p83 = scmp.eq.s32.totalorder %s20, 0
      %p84 = por %p82, %p83
      %p85 = scmp.ne.s32.totalorder %s74, %s77
      %p86 = scmp.eq.s32.totalorder %s25, 1
      %p87 = por %p85, %p86
      %p88 = scmp.ne.s32.totalorder %s77, %s78
      %p89 = scmp.eq.s32.totalorder %s25, 0
      %p90 = por %p88, %p89
      %p91 = scmp.ne.s32.totalorder %s77, %s78
      %p92 = scmp.eq.s32.totalorder %s26, 1
      %p93 = por %p91, %p92
      %p95 = scmp.ne.s32.totalorder %s78, %s94
      %p96 = scmp.eq.s32.totalorder %s26, 0
      %p97 = por %p95, %p96
      %s99 = sadd.s32 %s98, 1
      %p102 = scmp.eq.s32.totalorder %s20, 1
      %p103 = scmp.ne.s32.totalorder %s98, %s100
      %p104 = scmp.eq.s32.totalorder %s20, 0
      %p105 = por %p103, %p104
      %p106 = scmp.ne.s32.totalorder %s98, %s100
      %p107 = scmp.eq.s32.totalorder %s25, 1
      %p108 = por %p106, %p107
      %p109 = scmp.ne.s32.totalorder %s100, %s101
      %p110 = scmp.eq.s32.totalorder %s25, 0
      %p111 = por %p109, %p110
      %p112 = scmp.ne.s32.totalorder %s100, %s101
      %p113 = scmp.eq.s32.totalorder %s26, 1
      %p114 = por %p112, %p113
      %p116 = scmp.ne.s32.totalorder %s101, %s115
      %p117 = scmp.eq.s32.totalorder %s26, 0
      %p118 = por %p116, %p117
      %s120 = sadd.s32 %s119, 1
      %p123 = scmp.eq.s32.totalorder %s20, 1
      %p124 = scmp.ne.s32.totalorder %s119, %s121
      %p125 = scmp.eq.s32.totalorder %s20, 0
      %p126 = por %p124, %p125
      %p127 = scmp.ne.s32.totalorder %s119, %s121
      %p128 = scmp.eq.s32.totalorder %s25, 1
      %p129 = por %p127, %p128
      %p130 = scmp.ne.s32.totalorder %s121, %s122
      %p131 = scmp.eq.s32.totalorder %s25, 0
      %p132 = por %p130, %p131
      %p133 = scmp.ne.s32.totalorder %s121, %s122
      %p134 = scmp.eq.s32.totalorder %s26, 1
      %p135 = por %p133, %p134
      %p137 = scmp.ne.s32.totalorder %s122, %s136
      %p138 = scmp.eq.s32.totalorder %s26, 0
      %p139 = por %p137, %p138
      %s140 = ssub.s32 %s27, %s39
      %s141 = ssub.s32 %s28, %s35
      %s142 = sor.u32 %s140, %s141
      %p143 = scmp.eq.s32.totalorder %s142, 0
      %s145 = sadd.s32 %s144, 1
      %s146 = scalar_select %p143, %s144, %s145
      %p149 = pneg %p143
      %p150 = scmp.eq.s32.totalorder %s20, 1
      %p151 = por %p149, %p150
      %p152 = scmp.ne.s32.totalorder %s144, %s147
      %p153 = scmp.eq.s32.totalorder %s20, 0
      %p154 = por %p152, %p153
      %p155 = scmp.ne.s32.totalorder %s144, %s147
      %p156 = scmp.eq.s32.totalorder %s25, 1
      %p157 = por %p155, %p156
      %p158 = scmp.ne.s32.totalorder %s147, %s148
      %p159 = scmp.eq.s32.totalorder %s25, 0
      %p160 = por %p158, %p159
      %p161 = scmp.ne.s32.totalorder %s147, %s148
      %p162 = scmp.eq.s32.totalorder %s26, 1
      %p163 = por %p161, %p162
      %p165 = scmp.ne.s32.totalorder %s148, %s164
      %p166 = scmp.eq.s32.totalorder %s26, 0
      %p167 = por %p165, %p166
      %p168 = scmp.le.s32.totalorder 1, %s20
      %p169 = scmp.lt.s32.totalorder %s20, 3
      %p170 = pnand %p168, %p169
      %p171 = pneg %p170
      // Predicated region
      $region9: #{tpu_custom_call.1} parent=5 // pred_check
        _
      $region10: #{tpu_custom_call.1} parent=5 // pred_check_branch
        %173 = sbr.rel (%p170) target = $region12
      $region11: #{tpu_custom_call.1} parent=5 // pred_region
        %s174 = ssub.s32 %s20, 1
        // Predicated region
        $region13: #{tpu_custom_call.1} parent=11 // pred_check
          %p175 = pneg %p111
        $region14: #{tpu_custom_call.1} parent=11 // pred_check_branch
          %177 = sbr.rel (%p175) target = $region16
        $region15: #{tpu_custom_call.1} parent=11 // pred_region
          %179 = vsyncadd [#allocation6], 0
          %s180 = sshll.u32 %s2, 4
          %s181 = int_to_ptr.hbm [resolvable:$true] %s180
          %s182 = sshll.u32 [#allocation7], 4
          %s183 = int_to_ptr.vmem [resolvable:$true] %s182
          %188 = dma.hbm_to_vmem [thread:$0]  %s181, 2304, %s183, [#allocation6], 128, 128, 8
        $region16: #{tpu_custom_call.1} parent=11 // pred_fallthru
          _
        // Predicated region
        $region17: #{tpu_custom_call.1} parent=11 // pred_check
          %p189 = pneg %p132
        $region18: #{tpu_custom_call.1} parent=11 // pred_check_branch
          %191 = sbr.rel (%p189) target = $region20
        $region19: #{tpu_custom_call.1} parent=11 // pred_region
          %193 = vsyncadd [#allocation9], 0
          %s194 = sshll.u32 %s3, 4
          %s195 = int_to_ptr.hbm [resolvable:$true] %s194
          %s196 = sshll.u32 [#allocation8], 4
          %s197 = int_to_ptr.vmem [resolvable:$true] %s196
          %202 = dma.hbm_to_vmem [thread:$0]  %s195, 256, %s197, [#allocation9], 128, 128, 8
        $region20: #{tpu_custom_call.1} parent=11 // pred_fallthru
          _
      $region12: #{tpu_custom_call.1} parent=5 // pred_fallthru
        _
      %p203 = scmp.lt.s32.totalorder %s20, 2
      // Predicated region
      $region21: #{tpu_custom_call.1} parent=5 // pred_check
        %p204 = pneg %p203
      $region22: #{tpu_custom_call.1} parent=5 // pred_check_branch
        %206 = sbr.rel (%p204) target = $region24
      $region23: #{tpu_custom_call.1} parent=5 // pred_region
        // Predicated region
        $region25: #{tpu_custom_call.1} parent=23 // pred_check
          %p207 = pneg %p54
        $region26: #{tpu_custom_call.1} parent=23 // pred_check_branch
          %209 = sbr.rel (%p207) target = $region28
        $region27: #{tpu_custom_call.1} parent=23 // pred_region
          %s210 = sand.u32 %s44, 1
          %s211 = scalar_lea.sflag [#allocation3], %s210
          %s212 = sand.u32 %s44, 1
          %s213 = smul.addr %s212, 32
          %s214 = scalar_lea.vmem [#allocation2], %s213
          %216 = vsyncadd %s211, 0
          %s217 = smul.addr %s27, 8
          %s218 = sadd.s32 %s28, %s217
          %s219 = smul.addr %s218, 8
          %s220 = scalar_lea.hbm %s0, %s219
          %s221 = sshll.u32 %s220, 4
          %s222 = int_to_ptr.hbm [resolvable:$true] %s221
          %s223 = sshll.u32 %s214, 4
          %s224 = int_to_ptr.vmem [resolvable:$true] %s223
          %229 = dma.hbm_to_vmem [thread:$0]  %s222, 512, %s224, %s211, 256, 128, 8
        $region28: #{tpu_custom_call.1} parent=23 // pred_fallthru
          _
        // Predicated region
        $region29: #{tpu_custom_call.1} parent=23 // pred_check
          %p230 = pneg %p84
        $region30: #{tpu_custom_call.1} parent=23 // pred_check_branch
          %232 = sbr.rel (%p230) target = $region32
        $region31: #{tpu_custom_call.1} parent=23 // pred_region
          %s233 = sand.u32 %s20, 1
          %s234 = scalar_lea.sflag [#allocation6], %s233
          %s235 = sand.u32 %s74, 1
          %s236 = smul.addr %s235, 32
          %s237 = scalar_lea.vmem [#allocation5], %s236
          %s238 = sadd.s32 %s28, 1
          %240 = vsyncadd %s234, 0
          %s241 = smul.addr %s27, 8
          %s242 = sadd.s32 %s238, %s241
          %s243 = smul.addr %s242, 8
          %s244 = scalar_lea.hbm %s1, %s243
          %s245 = sshll.u32 %s244, 4
          %s246 = int_to_ptr.hbm [resolvable:$true] %s245
          %s247 = sshll.u32 %s237, 4
          %s248 = int_to_ptr.vmem [resolvable:$true] %s247
          %253 = dma.hbm_to_vmem [thread:$0]  %s246, 512, %s248, %s234, 256, 128, 8
        $region32: #{tpu_custom_call.1} parent=23 // pred_fallthru
          _
      $region24: #{tpu_custom_call.1} parent=5 // pred_fallthru
        _
      %p254 = scmp.le.s32.totalorder 1, %s20
      %p255 = scmp.lt.s32.totalorder %s20, 3
      %p256 = pnand %p254, %p255
      %p257 = pneg %p256
      // Predicated region
      $region33: #{tpu_custom_call.1} parent=5 // pred_check
        _
      $region34: #{tpu_custom_call.1} parent=5 // pred_check_branch
        %259 = sbr.rel (%p256) target = $region36
      $region35: #{tpu_custom_call.1} parent=5 // pred_region
        %s260 = ssub.s32 %s20, 1
        %s261 = sand.u32 %s47, 1
        %s262 = scalar_lea.sflag [#allocation3], %s261
        %s263 = sand.u32 %s47, 1
        %s264 = smul.addr %s263, 32
        %s265 = scalar_lea.vmem [#allocation2], %s264
        // Predicated region
        $region37: #{tpu_custom_call.1} parent=35 // pred_check
          %p266 = pneg %p60
        $region38: #{tpu_custom_call.1} parent=35 // pred_check_branch
          %268 = sbr.rel (%p266) target = $region40
        $region39: #{tpu_custom_call.1} parent=35 // pred_region
          %270 = dma.done %s262, 512
        $region40: #{tpu_custom_call.1} parent=35 // pred_fallthru
          _
        %s271 = sand.u32 %s25, 1
        %s272 = scalar_lea.sflag [#allocation6], %s271
        %s273 = sand.u32 %s77, 1
        %s274 = smul.addr %s273, 32
        %s275 = scalar_lea.vmem [#allocation5], %s274
        // Predicated region
        $region41: #{tpu_custom_call.1} parent=35 // pred_check
          %p276 = pneg %p90
        $region42: #{tpu_custom_call.1} parent=35 // pred_check_branch
          %278 = sbr.rel (%p276) target = $region44
        $region43: #{tpu_custom_call.1} parent=35 // pred_region
          %280 = dma.done %s272, 512
        $region44: #{tpu_custom_call.1} parent=35 // pred_fallthru
          _
        // Predicated region
        $region45: #{tpu_custom_call.1} parent=35 // pred_check
          %p281 = pneg %p111
        $region46: #{tpu_custom_call.1} parent=35 // pred_check_branch
          %283 = sbr.rel (%p281) target = $region48
        $region47: #{tpu_custom_call.1} parent=35 // pred_region
          %285 = dma.done [#allocation6], 2304
        $region48: #{tpu_custom_call.1} parent=35 // pred_fallthru
          _
        // Predicated region
        $region49: #{tpu_custom_call.1} parent=35 // pred_check
          %p286 = pneg %p132
        $region50: #{tpu_custom_call.1} parent=35 // pred_check_branch
          %288 = sbr.rel (%p286) target = $region52
        $region51: #{tpu_custom_call.1} parent=35 // pred_region
          %290 = dma.done [#allocation9], 256
        $region52: #{tpu_custom_call.1} parent=35 // pred_fallthru
          _
        %s291 = sand.u32 %s47, 1
        %s292 = scalar_lea.sflag [#allocation3], %s291
        %s293 = sand.u32 %s47, 1
        %s294 = smul.addr %s293, 32
        %s295 = scalar_lea.vmem [#allocation2], %s294
        %p296 = pneg %p60
        %p297 = pneg %p57
        %s298 = sand.u32 %s25, 1
        %s299 = scalar_lea.sflag [#allocation6], %s298
        %s300 = sand.u32 %s77, 1
        %s301 = smul.addr %s300, 32
        %s302 = scalar_lea.vmem [#allocation5], %s301
        %p303 = pneg %p90
        %p304 = pneg %p87
        %p305 = pneg %p111
        %p306 = pneg %p108
        %p307 = pneg %p132
        %p308 = pneg %p129
        %p309 = pneg %p160
        %p310 = pneg %p157
        %s311 = sand.u32 %s147, 1
        %s312 = scalar_lea.sflag [#allocation4], %s311
        %s313 = sand.u32 %s147, 1
        %s314 = smul.addr %s313, 16
        %s315 = scalar_lea.vmem [#allocation10], %s314
        %s316 = sadd.s32 %s30, 1
        %v317 = vld [vmem:[%s265] sm:$0xff]
        %v318 = vld [vmem:[%s265 + $0x8] sm:$0xff]
        %v319 = vld [vmem:[%s265 + $0x10] sm:$0xff]
        %v320 = vld [vmem:[%s265 + $0x18] sm:$0xff]
        %v321 = vld [vmem:[%s275] sm:$0xff]
        %v322 = vld [vmem:[%s275 + $0x8] sm:$0xff]
        %v323 = vld [vmem:[%s275 + $0x10] sm:$0xff]
        %v324 = vld [vmem:[%s275 + $0x18] sm:$0xff]
        %333 = vrot.lane.b32.xlu0 %v317, 127
        %v334 = vpop.permute.xlu0 %333
        %335 = vrot.lane.b32.xlu0 %v321, 127
        %v336 = vpop.permute.xlu0 %335
        %337 = vrot.lane.b32.xlu0 %v318, 127
        %v338 = vpop.permute.xlu0 %337
        %339 = vrot.lane.b32.xlu0 %v322, 127
        %v340 = vpop.permute.xlu0 %339
        %341 = vrot.lane.b32.xlu0 %v319, 127
        %v342 = vpop.permute.xlu0 %341
        %343 = vrot.lane.b32.xlu0 %v323, 127
        %v344 = vpop.permute.xlu0 %343
        %345 = vrot.lane.b32.xlu0 %v320, 127
        %v346 = vpop.permute.xlu0 %345
        %347 = vrot.lane.b32.xlu0 %v324, 127
        %v348 = vpop.permute.xlu0 %347
        %vm349 = vcmask 1039360
        %v350 = vsel %vm349, %v334, %v336
        %v351 = vsel %vm349, %v338, %v340
        %v352 = vsel %vm349, %v342, %v344
        %v353 = vsel %vm349, %v346, %v348
        %358 = vrot.lane.b32.xlu0 %v317, 126
        %v359 = vpop.permute.xlu0 %358
        %360 = vrot.lane.b32.xlu0 %v321, 126
        %v361 = vpop.permute.xlu0 %360
        %362 = vrot.lane.b32.xlu0 %v318, 126
        %v363 = vpop.permute.xlu0 %362
        %364 = vrot.lane.b32.xlu0 %v322, 126
        %v365 = vpop.permute.xlu0 %364
        %366 = vrot.lane.b32.xlu0 %v319, 126
        %v367 = vpop.permute.xlu0 %366
        %368 = vrot.lane.b32.xlu0 %v323, 126
        %v369 = vpop.permute.xlu0 %368
        %370 = vrot.lane.b32.xlu0 %v320, 126
        %v371 = vpop.permute.xlu0 %370
        %372 = vrot.lane.b32.xlu0 %v324, 126
        %v373 = vpop.permute.xlu0 %372
        %vm374 = vcmask 1031168
        %v375 = vsel %vm374, %v359, %v361
        %v376 = vsel %vm374, %v363, %v365
        %v377 = vsel %vm374, %v367, %v369
        %v378 = vsel %vm374, %v371, %v373
        %383 = vrot.lane.b32.xlu0 %v317, 125
        %v384 = vpop.permute.xlu0 %383
        %385 = vrot.lane.b32.xlu0 %v321, 125
        %v386 = vpop.permute.xlu0 %385
        %387 = vrot.lane.b32.xlu0 %v318, 125
        %v388 = vpop.permute.xlu0 %387
        %389 = vrot.lane.b32.xlu0 %v322, 125
        %v390 = vpop.permute.xlu0 %389
        %391 = vrot.lane.b32.xlu0 %v319, 125
        %v392 = vpop.permute.xlu0 %391
        %393 = vrot.lane.b32.xlu0 %v323, 125
        %v394 = vpop.permute.xlu0 %393
        %395 = vrot.lane.b32.xlu0 %v320, 125
        %v396 = vpop.permute.xlu0 %395
        %397 = vrot.lane.b32.xlu0 %v324, 125
        %v398 = vpop.permute.xlu0 %397
        %vm399 = vcmask 1022976
        %v400 = vsel %vm399, %v384, %v386
        %v401 = vsel %vm399, %v388, %v390
        %v402 = vsel %vm399, %v392, %v394
        %v403 = vsel %vm399, %v396, %v398
        %v408 = vld [vmem:[#allocation7] sm:$0xff]
        %v409 = vld [vmem:[#allocation7 + $0x8] sm:$0xff]
        %v410 = vld [vmem:[#allocation7 + $0x10] sm:$0xff]
        %v411 = vld [vmem:[#allocation7 + $0x18] sm:$0xff]
        %v412 = vld [vmem:[#allocation7 + $0x20] sm:$0xff]
        %v413 = vld [vmem:[#allocation7 + $0x28] sm:$0xff]
        %v414 = vld [vmem:[#allocation7 + $0x30] sm:$0xff]
        %v415 = vld [vmem:[#allocation7 + $0x38] sm:$0xff]
        %v416 = vld [vmem:[#allocation7 + $0x40] sm:$0xff]
        %v417 = vld [vmem:[#allocation7 + $0x48] sm:$0xff]
        %v418 = vld [vmem:[#allocation7 + $0x50] sm:$0xff]
        %v419 = vld [vmem:[#allocation7 + $0x58] sm:$0xff]
        %v420 = vld [vmem:[#allocation7 + $0x60] sm:$0xff]
        %v421 = vld [vmem:[#allocation7 + $0x68] sm:$0xff]
        %v422 = vld [vmem:[#allocation7 + $0x70] sm:$0xff]
        %v423 = vld [vmem:[#allocation7 + $0x78] sm:$0xff]
        %v424 = vld [vmem:[#allocation7 + $0x80] sm:$0xff]
        %v425 = vld [vmem:[#allocation7 + $0x88] sm:$0xff]
        %426 = vmatpush.msra.mxu0 %v403
        %427 = vmatpush.msra.mxu0 %v402
        %428 = vmatpush.msra.mxu0 %v401
        %429 = vmatpush.msra.mxu0 %v400
        %430 = vmatpush.msra.mxu0 %v378
        %431 = vmatpush.msra.mxu0 %v377
        %432 = vmatpush.msra.mxu0 %v376
        %433 = vmatpush.msra.mxu0 %v375
        %434 = vmatpush.msra.mxu0 %v353
        %435 = vmatpush.msra.mxu0 %v352
        %436 = vmatpush.msra.mxu0 %v351
        %437 = vmatpush.msra.mxu0 %v350
        %438 = vmatpush.msra.mxu0 %v320
        %439 = vmatpush.msra.mxu0 %v319
        %440 = vmatpush.msra.mxu0 %v318
        %441 = vmatpush.msra.mxu0 %v317
        %442 = vmatmul.f32.gmra.mxu0 %v408
        %v443 = vpop.f32.mrf.mxu0
        %v444 = vadd.f32 0.0, %v443
        %445 = vmatmul.f32.gmra.mxu0 %v409
        %v446 = vpop.f32.mrf.mxu0
        %v447 = vadd.f32 0.0, %v446
        %448 = vmatmul.f32.gmra.mxu0 %v410
        %v449 = vpop.f32.mrf.mxu0
        %v450 = vadd.f32 0.0, %v449
        %451 = vmatmul.f32.gmra.mxu0 %v411
        %v452 = vpop.f32.mrf.mxu0
        %v453 = vadd.f32 0.0, %v452
        %454 = vmatmul.f32.gmra.mxu0 %v412
        %v455 = vpop.f32.mrf.mxu0
        %v456 = vadd.f32 0.0, %v455
        %457 = vmatmul.f32.gmra.mxu0 %v413
        %v458 = vpop.f32.mrf.mxu0
        %v459 = vadd.f32 0.0, %v458
        %460 = vmatmul.f32.gmra.mxu0 %v414
        %v461 = vpop.f32.mrf.mxu0
        %v462 = vadd.f32 0.0, %v461
        %463 = vmatmul.f32.gmra.mxu0 %v415
        %v464 = vpop.f32.mrf.mxu0
        %v465 = vadd.f32 0.0, %v464
        %466 = vmatmul.f32.gmra.mxu0 %v416
        %v467 = vpop.f32.mrf.mxu0
        %v468 = vadd.f32 0.0, %v467
        %469 = vmatmul.f32.gmra.mxu0 %v417
        %v470 = vpop.f32.mrf.mxu0
        %v471 = vadd.f32 0.0, %v470
        %472 = vmatmul.f32.gmra.mxu0 %v418
        %v473 = vpop.f32.mrf.mxu0
        %v474 = vadd.f32 0.0, %v473
        %475 = vmatmul.f32.gmra.mxu0 %v419
        %v476 = vpop.f32.mrf.mxu0
        %v477 = vadd.f32 0.0, %v476
        %478 = vmatmul.f32.gmra.mxu0 %v420
        %v479 = vpop.f32.mrf.mxu0
        %v480 = vadd.f32 0.0, %v479
        %481 = vmatmul.f32.gmra.mxu0 %v421
        %v482 = vpop.f32.mrf.mxu0
        %v483 = vadd.f32 0.0, %v482
        %484 = vmatmul.f32.gmra.mxu0 %v422
        %v485 = vpop.f32.mrf.mxu0
        %v486 = vadd.f32 0.0, %v485
        %487 = vmatmul.f32.gmra.mxu0 %v423
        %v488 = vpop.f32.mrf.mxu0
        %v489 = vadd.f32 0.0, %v488
        %490 = vmatmul.f32.gmra.mxu0 %v424
        %v491 = vpop.f32.mrf.mxu0
        %v492 = vadd.f32 0.0, %v491
        %493 = vmatmul.f32.gmra.mxu0 %v425
        %v494 = vpop.f32.mrf.mxu0
        %v495 = vadd.f32 0.0, %v494
        %496 = vdwg.mxu0
        %v497 = vmul.f32 %v444, %v444
        %v498 = vmul.f32 %v447, %v447
        %v499 = vmul.f32 %v450, %v450
        %v500 = vmul.f32 %v453, %v453
        %v501 = vmul.f32 %v456, %v456
        %v502 = vmul.f32 %v459, %v459
        %v503 = vmul.f32 %v462, %v462
        %v504 = vmul.f32 %v465, %v465
        %v505 = vmul.f32 %v468, %v468
        %v506 = vmul.f32 %v471, %v471
        %v507 = vmul.f32 %v474, %v474
        %v508 = vmul.f32 %v477, %v477
        %v509 = vmul.f32 %v480, %v480
        %v510 = vmul.f32 %v483, %v483
        %v511 = vmul.f32 %v486, %v486
        %v512 = vmul.f32 %v489, %v489
        %v513 = vmul.f32 %v492, %v492
        %v514 = vmul.f32 %v495, %v495
        %v515 = vadd.f32 %v497, %v506
        %v516 = vadd.f32 %v498, %v507
        %v517 = vadd.f32 %v499, %v508
        %v518 = vadd.f32 %v500, %v509
        %v519 = vadd.f32 %v501, %v510
        %v520 = vadd.f32 %v502, %v511
        %v521 = vadd.f32 %v503, %v512
        %v522 = vadd.f32 %v504, %v513
        %v523 = vadd.f32 %v505, %v514
        %v524 = vrsqrt.pop %v515
        %v525 = vmul.f32 %v524, %v515
        %v526 = vmul.f32 %v525, %v524
        %v527 = vmul.f32 0.5, %v526
        %v528 = vsub.f32 1.5, %v527
        %v529 = vmul.f32 %v524, %v528
        %v530 = vmul.f32 %v515, %v529
        %vm531 = vcmp.eq.f32.partialorder %v515, inf
        %v532 = vsel %vm531, %v515, %v530
        %vm533 = vcmp.eq.f32.partialorder %v515, 0.0
        %v534 = vand.u32 %v515, 2147483648
        %v535 = vsel %vm533, %v534, %v532
        %v536 = vrsqrt.pop %v516
        %v537 = vmul.f32 %v536, %v516
        %v538 = vmul.f32 %v537, %v536
        %v539 = vmul.f32 0.5, %v538
        %v540 = vsub.f32 1.5, %v539
        %v541 = vmul.f32 %v536, %v540
        %v542 = vmul.f32 %v516, %v541
        %vm543 = vcmp.eq.f32.partialorder %v516, inf
        %v544 = vsel %vm543, %v516, %v542
        %vm545 = vcmp.eq.f32.partialorder %v516, 0.0
        %v546 = vand.u32 %v516, 2147483648
        %v547 = vsel %vm545, %v546, %v544
        %v548 = vrsqrt.pop %v517
        %v549 = vmul.f32 %v548, %v517
        %v550 = vmul.f32 %v549, %v548
        %v551 = vmul.f32 0.5, %v550
        %v552 = vsub.f32 1.5, %v551
        %v553 = vmul.f32 %v548, %v552
        %v554 = vmul.f32 %v517, %v553
        %vm555 = vcmp.eq.f32.partialorder %v517, inf
        %v556 = vsel %vm555, %v517, %v554
        %vm557 = vcmp.eq.f32.partialorder %v517, 0.0
        %v558 = vand.u32 %v517, 2147483648
        %v559 = vsel %vm557, %v558, %v556
        %v560 = vrsqrt.pop %v518
        %v561 = vmul.f32 %v560, %v518
        %v562 = vmul.f32 %v561, %v560
        %v563 = vmul.f32 0.5, %v562
        %v564 = vsub.f32 1.5, %v563
        %v565 = vmul.f32 %v560, %v564
        %v566 = vmul.f32 %v518, %v565
        %vm567 = vcmp.eq.f32.partialorder %v518, inf
        %v568 = vsel %vm567, %v518, %v566
        %vm569 = vcmp.eq.f32.partialorder %v518, 0.0
        %v570 = vand.u32 %v518, 2147483648
        %v571 = vsel %vm569, %v570, %v568
        %v572 = vrsqrt.pop %v519
        %v573 = vmul.f32 %v572, %v519
        %v574 = vmul.f32 %v573, %v572
        %v575 = vmul.f32 0.5, %v574
        %v576 = vsub.f32 1.5, %v575
        %v577 = vmul.f32 %v572, %v576
        %v578 = vmul.f32 %v519, %v577
        %vm579 = vcmp.eq.f32.partialorder %v519, inf
        %v580 = vsel %vm579, %v519, %v578
        %vm581 = vcmp.eq.f32.partialorder %v519, 0.0
        %v582 = vand.u32 %v519, 2147483648
        %v583 = vsel %vm581, %v582, %v580
        %v584 = vrsqrt.pop %v520
        %v585 = vmul.f32 %v584, %v520
        %v586 = vmul.f32 %v585, %v584
        %v587 = vmul.f32 0.5, %v586
        %v588 = vsub.f32 1.5, %v587
        %v589 = vmul.f32 %v584, %v588
        %v590 = vmul.f32 %v520, %v589
        %vm591 = vcmp.eq.f32.partialorder %v520, inf
        %v592 = vsel %vm591, %v520, %v590
        %vm593 = vcmp.eq.f32.partialorder %v520, 0.0
        %v594 = vand.u32 %v520, 2147483648
        %v595 = vsel %vm593, %v594, %v592
        %v596 = vrsqrt.pop %v521
        %v597 = vmul.f32 %v596, %v521
        %v598 = vmul.f32 %v597, %v596
        %v599 = vmul.f32 0.5, %v598
        %v600 = vsub.f32 1.5, %v599
        %v601 = vmul.f32 %v596, %v600
        %v602 = vmul.f32 %v521, %v601
        %vm603 = vcmp.eq.f32.partialorder %v521, inf
        %v604 = vsel %vm603, %v521, %v602
        %vm605 = vcmp.eq.f32.partialorder %v521, 0.0
        %v606 = vand.u32 %v521, 2147483648
        %v607 = vsel %vm605, %v606, %v604
        %v608 = vrsqrt.pop %v522
        %v609 = vmul.f32 %v608, %v522
        %v610 = vmul.f32 %v609, %v608
        %v611 = vmul.f32 0.5, %v610
        %v612 = vsub.f32 1.5, %v611
        %v613 = vmul.f32 %v608, %v612
        %v614 = vmul.f32 %v522, %v613
        %vm615 = vcmp.eq.f32.partialorder %v522, inf
        %v616 = vsel %vm615, %v522, %v614
        %vm617 = vcmp.eq.f32.partialorder %v522, 0.0
        %v618 = vand.u32 %v522, 2147483648
        %v619 = vsel %vm617, %v618, %v616
        %v620 = vrsqrt.pop %v523
        %v621 = vmul.f32 %v620, %v523
        %v622 = vmul.f32 %v621, %v620
        %v623 = vmul.f32 0.5, %v622
        %v624 = vsub.f32 1.5, %v623
        %v625 = vmul.f32 %v620, %v624
        %v626 = vmul.f32 %v523, %v625
        %vm627 = vcmp.eq.f32.partialorder %v523, inf
        %v628 = vsel %vm627, %v523, %v626
        %vm629 = vcmp.eq.f32.partialorder %v523, 0.0
        %v630 = vand.u32 %v523, 2147483648
        %v631 = vsel %vm629, %v630, %v628
        %v632 = vld [vmem:[#allocation8] sm:$0xff]
        %v633 = vld [vmem:[#allocation8 + $0x8] sm:$0xff]
        %vm634 = vcmask 588800
        %v636 = vsel %vm634, %v632, 0
        %v639 = vsel %vm634, %v633, 0
        %641 = vmatpush.msra.mxu0 0.0
        %642 = vmatpush.msra.mxu0 0.0
        %643 = vmatpush.msra.mxu0 0.0
        %644 = vmatpush.msra.mxu0 0.0
        %645 = vmatpush.msra.mxu0 0.0
        %646 = vmatpush.msra.mxu0 0.0
        %647 = vmatpush.msra.mxu0 0.0
        %648 = vmatpush.msra.mxu0 %v631
        %649 = vmatpush.msra.mxu0 %v619
        %650 = vmatpush.msra.mxu0 %v607
        %651 = vmatpush.msra.mxu0 %v595
        %652 = vmatpush.msra.mxu0 %v583
        %653 = vmatpush.msra.mxu0 %v571
        %654 = vmatpush.msra.mxu0 %v559
        %655 = vmatpush.msra.mxu0 %v547
        %656 = vmatpush.msra.mxu0 %v535
        %657 = vmatmul.f32.gmra.mxu0 %v636
        %v658 = vpop.f32.mrf.mxu0
        %v659 = vadd.f32 0.0, %v658
        %660 = vmatmul.f32.gmra.mxu0 %v639
        %v661 = vpop.f32.mrf.mxu0
        %v662 = vadd.f32 0.0, %v661
        %663 = vdwg.mxu0
        %664 = vst [vmem:[%s315] sm:$0xff] %v659
        %665 = vst [vmem:[%s315 + $0x8] sm:$0xff] %v662
        %s666 = sand.u32 %s147, 1
        %s667 = scalar_lea.sflag [#allocation4], %s666
        %s668 = sand.u32 %s147, 1
        %s669 = smul.addr %s668, 16
        %s670 = scalar_lea.vmem [#allocation10], %s669
        // Predicated region
        $region53: #{tpu_custom_call.1} parent=35 // pred_check
          %p671 = pneg %p157
        $region54: #{tpu_custom_call.1} parent=35 // pred_check_branch
          %673 = sbr.rel (%p671) target = $region56
        $region55: #{tpu_custom_call.1} parent=35 // pred_region
          %675 = vsyncadd %s667, 0
          %s676 = smul.addr %s29, 2
          %s677 = sadd.s32 %s30, %s676
          %s678 = smul.addr %s677, 8
          %s679 = scalar_lea.hbm %s4, %s678
          %s680 = sshll.u32 %s670, 4
          %s681 = int_to_ptr.vmem [resolvable:$true] %s680
          %s682 = sshll.u32 %s679, 4
          %s683 = int_to_ptr.hbm [resolvable:$true] %s682
          %688 = dma.vmem_to_hbm [thread:$0]  %s681, 256, %s683, %s667, 128, 128, 8
        $region56: #{tpu_custom_call.1} parent=35 // pred_fallthru
          _
      $region36: #{tpu_custom_call.1} parent=5 // pred_fallthru
        _
      %p689 = scmp.le.s32.totalorder 2, %s20
      // Predicated region
      $region57: #{tpu_custom_call.1} parent=5 // pred_check
        %p690 = pneg %p689
      $region58: #{tpu_custom_call.1} parent=5 // pred_check_branch
        %692 = sbr.rel (%p690) target = $region60
      $region59: #{tpu_custom_call.1} parent=5 // pred_region
        %s693 = ssub.s32 %s20, 2
        // Predicated region
        $region61: #{tpu_custom_call.1} parent=59 // pred_check
          %p694 = pneg %p163
        $region62: #{tpu_custom_call.1} parent=59 // pred_check_branch
          %696 = sbr.rel (%p694) target = $region64
        $region63: #{tpu_custom_call.1} parent=59 // pred_region
          %s697 = sand.u32 %s148, 1
          %s698 = scalar_lea.sflag [#allocation4], %s697
          %s699 = sand.u32 %s148, 1
          %s700 = smul.addr %s699, 16
          %s701 = scalar_lea.vmem [#allocation10], %s700
          %703 = dma.done %s698, 256
        $region64: #{tpu_custom_call.1} parent=59 // pred_fallthru
          _
      $region60: #{tpu_custom_call.1} parent=5 // pred_fallthru
        _
    $region6: #{tpu_custom_call.1} parent=1 // loop_footer
      %s24 = sadd.s32 1, %s20
    $region7: #{tpu_custom_call.1} parent=1 // loop_footer_branch
      %19 = sbr.rel target = $region3
    $region8: #{tpu_custom_call.1} parent=1 // loop_exit
      _
    %704 = vsyncpa [#allocation3], 1
    %s705 = scalar_lea.sflag [#allocation3], 1
    %706 = vsyncpa %s705, 1
    %707 = vsyncpa [#allocation6], 1
    %s708 = scalar_lea.sflag [#allocation6], 1
    %709 = vsyncpa %s708, 1
    %710 = vsyncpa [#allocation9], 1
    %711 = vsyncpa [#allocation4], 1
    %s712 = scalar_lea.sflag [#allocation4], 1
    %713 = vsyncpa %s712, 1

// kernel: tpu_custom_call.1
$region0: #{tpu_custom_call.1}
  #allocation0 [shape = 'u32[]', space=smem, size = 0x4, offset = 0x4, fixed_abs, tag = 'smem constant byte address 0x4 - core index']
  #allocation1 [shape = 'u32[72,128]{1,0:T(1,128)}', space=vmem, size = 0x9000, scoped, tag = 'internal scratch']
  %s0 = inlined_call_operand.hbm [shape: f32[2,32,256], index: 0, kind: input, shape index: {}]
  %s1 = inlined_call_operand.hbm [shape: f32[2,32,256], index: 1, kind: input, shape index: {}]
  %s2 = inlined_call_operand.hbm [shape: f32[144,128], index: 2, kind: input, shape index: {}]
  %s3 = inlined_call_operand.hbm [shape: f32[16,72], index: 3, kind: input, shape index: {}]
  %s4 = inlined_call_operand.hbm [shape: f32[2,16,128], index: 4, kind: output, shape index: {}]
  %s5 = sld [smem:[#allocation0]]
  $region65: #{tpu_custom_call.1} parent=0
    _
  %s7 = ssub.s32 1, %s5
  %s8 = scalar_select 0, %s7, %s5
  $region1: #{tpu_custom_call.1} parent=0
    #allocation2 [shape = 'u8[32768]{0}', space=vmem, size = 0x8000, scoped, tag = 'input window, operand 0']
    #allocation3 [shape = 's32[2]{0}', space=sflag, size = 0x8, scoped, tag = 'scoped memory for tpu_custom_call.1']
    #allocation4 [shape = 's32[2]{0}', space=sflag, size = 0x8, scoped, tag = 'scoped memory for tpu_custom_call.1']
    #allocation5 [shape = 'u8[32768]{0}', space=vmem, size = 0x8000, scoped, tag = 'input window, operand 1']
    #allocation6 [shape = 's32[2]{0}', space=sflag, size = 0x8, scoped, tag = 'scoped memory for tpu_custom_call.1']
    #allocation7 [shape = 'u8[73728]{0}', space=vmem, size = 0x12000, scoped, tag = 'input window, operand 2, single buffered']
    #allocation8 [shape = 'u8[8192]{0}', space=vmem, size = 0x2000, scoped, tag = 'input window, operand 3, single buffered']
    #allocation9 [shape = 's32[1]{0}', space=sflag, size = 0x4, scoped, tag = 'scoped memory for tpu_custom_call.1']
    #allocation10 [shape = 'u8[16384]{0}', space=vmem, size = 0x4000, scoped, tag = 'output window, operand 0']
    %9 = vsyncpa [#allocation3], 0
    %s10 = scalar_lea.sflag [#allocation3], 1
    %11 = vsyncpa %s10, 0
    %12 = vsyncpa [#allocation6], 0
    %s13 = scalar_lea.sflag [#allocation6], 1
    %14 = vsyncpa %s13, 0
    %15 = vsyncpa [#allocation9], 0
    %16 = vsyncpa [#allocation4], 0
    %s17 = scalar_lea.sflag [#allocation4], 1
    %18 = vsyncpa %s17, 0
    loop: start=0, step=1, limit=4
    $region2: #{tpu_custom_call.1} parent=1 // loop_pre_header
      _
    $region3: #{tpu_custom_call.1} parent=1 // loop_header
      %s20 = sphi 0, %s24
      %p21 = scmp.ge.s32.totalorder %s20, 4
      %s27 = sphi 0, %s39
      %s28 = sphi 0, %s35
      %s29 = sphi 0, %s27
      %s30 = sphi 0, %s28
      %s31 = sphi 0, %s29
      %s32 = sphi 0, %s30
      %s44 = sphi 0, %s46
      %s47 = sphi 0, %s44
      %s48 = sphi 0, %s47
      %s64 = sphi 0, %s48
      %s74 = sphi 0, %s76
      %s77 = sphi 0, %s74
      %s78 = sphi 0, %s77
      %s94 = sphi 0, %s78
      %s98 = sphi 0, %s98
      %s100 = sphi 0, %s98
      %s101 = sphi 0, %s100
      %s115 = sphi 0, %s101
      %s119 = sphi 0, %s119
      %s121 = sphi 0, %s119
      %s122 = sphi 0, %s121
      %s136 = sphi 0, %s122
      %s144 = sphi 0, %s146
      %s147 = sphi 0, %s144
      %s148 = sphi 0, %s147
      %s164 = sphi 0, %s148
    $region4: #{tpu_custom_call.1} parent=1 // loop_header_branch
      %23 = sbr.rel (%p21) target = $region8
    $region5: #{tpu_custom_call.1} parent=1 // loop_body
      %s25 = ssub.s32 %s20, 1
      %s26 = ssub.s32 %s20, 2
      %s33 = sadd.s32 1, %s28
      %p34 = scmp.ge.s32.totalorder %s33, 1
      %s35 = scalar_select %p34, 0, %s33
      %s36 = sadd.s32 1, %s27
      %s37 = scalar_select %p34, %s36, %s27
      %p38 = scmp.ge.s32.totalorder %s37, 2
      %s39 = scalar_select %p38, 0, %s37
      %s40 = ssub.s32 %s27, %s39
      %s41 = ssub.s32 %s28, %s35
      %s42 = sor.u32 %s40, %s41
      %p43 = scmp.eq.s32.totalorder %s42, 0
      %s45 = sadd.s32 %s44, 1
      %s46 = scalar_select %p43, %s44, %s45
      %p49 = pneg %p43
      %p50 = scmp.eq.s32.totalorder %s20, 1
      %p51 = por %p49, %p50
      %p52 = scmp.ne.s32.totalorder %s44, %s47
      %p53 = scmp.eq.s32.totalorder %s20, 0
      %p54 = por %p52, %p53
      %p55 = scmp.ne.s32.totalorder %s44, %s47
      %p56 = scmp.eq.s32.totalorder %s25, 1
      %p57 = por %p55, %p56
      %p58 = scmp.ne.s32.totalorder %s47, %s48
      %p59 = scmp.eq.s32.totalorder %s25, 0
      %p60 = por %p58, %p59
      %p61 = scmp.ne.s32.totalorder %s47, %s48
      %p62 = scmp.eq.s32.totalorder %s26, 1
      %p63 = por %p61, %p62
      %p65 = scmp.ne.s32.totalorder %s48, %s64
      %p66 = scmp.eq.s32.totalorder %s26, 0
      %p67 = por %p65, %p66
      %s68 = sadd.s32 %s28, 1
      %s69 = sadd.s32 %s35, 1
      %s70 = ssub.s32 %s27, %s39
      %s71 = ssub.s32 %s68, %s69
      %s72 = sor.u32 %s70, %s71
      %p73 = scmp.eq.s32.totalorder %s72, 0
      %s75 = sadd.s32 %s74, 1
      %s76 = scalar_select %p73, %s74, %s75
      %p79 = pneg %p73
      %p80 = scmp.eq.s32.totalorder %s20, 1
      %p81 = por %p79, %p80
      %p82 = scmp.ne.s32.totalorder %s74, %s77
      %p83 = scmp.eq.s32.totalorder %s20, 0
      %p84 = por %p82, %p83
      %p85 = scmp.ne.s32.totalorder %s74, %s77
      %p86 = scmp.eq.s32.totalorder %s25, 1
      %p87 = por %p85, %p86
      %p88 = scmp.ne.s32.totalorder %s77, %s78
      %p89 = scmp.eq.s32.totalorder %s25, 0
      %p90 = por %p88, %p89
      %p91 = scmp.ne.s32.totalorder %s77, %s78
      %p92 = scmp.eq.s32.totalorder %s26, 1
      %p93 = por %p91, %p92
      %p95 = scmp.ne.s32.totalorder %s78, %s94
      %p96 = scmp.eq.s32.totalorder %s26, 0
      %p97 = por %p95, %p96
      %s99 = sadd.s32 %s98, 1
      %p102 = scmp.eq.s32.totalorder %s20, 1
      %p103 = scmp.ne.s32.totalorder %s98, %s100
      %p104 = scmp.eq.s32.totalorder %s20, 0
      %p105 = por %p103, %p104
      %p106 = scmp.ne.s32.totalorder %s98, %s100
      %p107 = scmp.eq.s32.totalorder %s25, 1
      %p108 = por %p106, %p107
      %p109 = scmp.ne.s32.totalorder %s100, %s101
      %p110 = scmp.eq.s32.totalorder %s25, 0
      %p111 = por %p109, %p110
      %p112 = scmp.ne.s32.totalorder %s100, %s101
      %p113 = scmp.eq.s32.totalorder %s26, 1
      %p114 = por %p112, %p113
      %p116 = scmp.ne.s32.totalorder %s101, %s115
      %p117 = scmp.eq.s32.totalorder %s26, 0
      %p118 = por %p116, %p117
      %s120 = sadd.s32 %s119, 1
      %p123 = scmp.eq.s32.totalorder %s20, 1
      %p124 = scmp.ne.s32.totalorder %s119, %s121
      %p125 = scmp.eq.s32.totalorder %s20, 0
      %p126 = por %p124, %p125
      %p127 = scmp.ne.s32.totalorder %s119, %s121
      %p128 = scmp.eq.s32.totalorder %s25, 1
      %p129 = por %p127, %p128
      %p130 = scmp.ne.s32.totalorder %s121, %s122
      %p131 = scmp.eq.s32.totalorder %s25, 0
      %p132 = por %p130, %p131
      %p133 = scmp.ne.s32.totalorder %s121, %s122
      %p134 = scmp.eq.s32.totalorder %s26, 1
      %p135 = por %p133, %p134
      %p137 = scmp.ne.s32.totalorder %s122, %s136
      %p138 = scmp.eq.s32.totalorder %s26, 0
      %p139 = por %p137, %p138
      %s140 = ssub.s32 %s27, %s39
      %s141 = ssub.s32 %s28, %s35
      %s142 = sor.u32 %s140, %s141
      %p143 = scmp.eq.s32.totalorder %s142, 0
      %s145 = sadd.s32 %s144, 1
      %s146 = scalar_select %p143, %s144, %s145
      %p149 = pneg %p143
      %p150 = scmp.eq.s32.totalorder %s20, 1
      %p151 = por %p149, %p150
      %p152 = scmp.ne.s32.totalorder %s144, %s147
      %p153 = scmp.eq.s32.totalorder %s20, 0
      %p154 = por %p152, %p153
      %p155 = scmp.ne.s32.totalorder %s144, %s147
      %p156 = scmp.eq.s32.totalorder %s25, 1
      %p157 = por %p155, %p156
      %p158 = scmp.ne.s32.totalorder %s147, %s148
      %p159 = scmp.eq.s32.totalorder %s25, 0
      %p160 = por %p158, %p159
      %p161 = scmp.ne.s32.totalorder %s147, %s148
      %p162 = scmp.eq.s32.totalorder %s26, 1
      %p163 = por %p161, %p162
      %p165 = scmp.ne.s32.totalorder %s148, %s164
      %p166 = scmp.eq.s32.totalorder %s26, 0
      %p167 = por %p165, %p166
      %p168 = scmp.le.s32.totalorder 1, %s20
      %p169 = scmp.lt.s32.totalorder %s20, 3
      %p170 = pnand %p168, %p169
      %p171 = pneg %p170
      // Predicated region
      $region9: #{tpu_custom_call.1} parent=5 // pred_check
        _
      $region10: #{tpu_custom_call.1} parent=5 // pred_check_branch
        %173 = sbr.rel (%p170) target = $region12
      $region11: #{tpu_custom_call.1} parent=5 // pred_region
        %s174 = ssub.s32 %s20, 1
        // Predicated region
        $region13: #{tpu_custom_call.1} parent=11 // pred_check
          %p175 = pneg %p111
        $region14: #{tpu_custom_call.1} parent=11 // pred_check_branch
          %177 = sbr.rel (%p175) target = $region16
        $region15: #{tpu_custom_call.1} parent=11 // pred_region
          %179 = vsyncadd [#allocation6], 0
          %s180 = sshll.u32 %s2, 4
          %s181 = int_to_ptr.hbm [resolvable:$true] %s180
          %s182 = sshll.u32 [#allocation7], 4
          %s183 = int_to_ptr.vmem [resolvable:$true] %s182
          %188 = dma.hbm_to_vmem [thread:$0]  %s181, 2304, %s183, [#allocation6], 128, 128, 8
        $region16: #{tpu_custom_call.1} parent=11 // pred_fallthru
          _
        // Predicated region
        $region17: #{tpu_custom_call.1} parent=11 // pred_check
          %p189 = pneg %p132
        $region18: #{tpu_custom_call.1} parent=11 // pred_check_branch
          %191 = sbr.rel (%p189) target = $region20
        $region19: #{tpu_custom_call.1} parent=11 // pred_region
          %193 = vsyncadd [#allocation9], 0
          %s194 = sshll.u32 %s3, 4
          %s195 = int_to_ptr.hbm [resolvable:$true] %s194
          %s196 = sshll.u32 [#allocation8], 4
          %s197 = int_to_ptr.vmem [resolvable:$true] %s196
          %202 = dma.hbm_to_vmem [thread:$0]  %s195, 256, %s197, [#allocation9], 128, 128, 8
        $region20: #{tpu_custom_call.1} parent=11 // pred_fallthru
          _
      $region12: #{tpu_custom_call.1} parent=5 // pred_fallthru
        _
      %p203 = scmp.lt.s32.totalorder %s20, 2
      // Predicated region
      $region21: #{tpu_custom_call.1} parent=5 // pred_check
        %p204 = pneg %p203
      $region22: #{tpu_custom_call.1} parent=5 // pred_check_branch
        %206 = sbr.rel (%p204) target = $region24
      $region23: #{tpu_custom_call.1} parent=5 // pred_region
        // Predicated region
        $region25: #{tpu_custom_call.1} parent=23 // pred_check
          %p207 = pneg %p54
        $region26: #{tpu_custom_call.1} parent=23 // pred_check_branch
          %209 = sbr.rel (%p207) target = $region28
        $region27: #{tpu_custom_call.1} parent=23 // pred_region
          %s210 = sand.u32 %s44, 1
          %s211 = scalar_lea.sflag [#allocation3], %s210
          %s212 = sand.u32 %s44, 1
          %s213 = smul.addr %s212, 32
          %s214 = scalar_lea.vmem [#allocation2], %s213
          %216 = vsyncadd %s211, 0
          %s217 = smul.addr %s27, 8
          %s218 = sadd.s32 %s28, %s217
          %s219 = smul.addr %s218, 8
          %s220 = scalar_lea.hbm %s0, %s219
          %s221 = sshll.u32 %s220, 4
          %s222 = int_to_ptr.hbm [resolvable:$true] %s221
          %s223 = sshll.u32 %s214, 4
          %s224 = int_to_ptr.vmem [resolvable:$true] %s223
          %229 = dma.hbm_to_vmem [thread:$0]  %s222, 512, %s224, %s211, 256, 128, 8
        $region28: #{tpu_custom_call.1} parent=23 // pred_fallthru
          _
        // Predicated region
        $region29: #{tpu_custom_call.1} parent=23 // pred_check
          %p230 = pneg %p84
        $region30: #{tpu_custom_call.1} parent=23 // pred_check_branch
          %232 = sbr.rel (%p230) target = $region32
        $region31: #{tpu_custom_call.1} parent=23 // pred_region
          %s233 = sand.u32 %s20, 1
          %s234 = scalar_lea.sflag [#allocation6], %s233
          %s235 = sand.u32 %s74, 1
          %s236 = smul.addr %s235, 32
          %s237 = scalar_lea.vmem [#allocation5], %s236
          %s238 = sadd.s32 %s28, 1
          %240 = vsyncadd %s234, 0
          %s241 = smul.addr %s27, 8
          %s242 = sadd.s32 %s238, %s241
          %s243 = smul.addr %s242, 8
          %s244 = scalar_lea.hbm %s1, %s243
          %s245 = sshll.u32 %s244, 4
          %s246 = int_to_ptr.hbm [resolvable:$true] %s245
          %s247 = sshll.u32 %s237, 4
          %s248 = int_to_ptr.vmem [resolvable:$true] %s247
          %253 = dma.hbm_to_vmem [thread:$0]  %s246, 512, %s248, %s234, 256, 128, 8
        $region32: #{tpu_custom_call.1} parent=23 // pred_fallthru
          _
      $region24: #{tpu_custom_call.1} parent=5 // pred_fallthru
        _
      %p254 = scmp.le.s32.totalorder 1, %s20
      %p255 = scmp.lt.s32.totalorder %s20, 3
      %p256 = pnand %p254, %p255
      %p257 = pneg %p256
      // Predicated region
      $region33: #{tpu_custom_call.1} parent=5 // pred_check
        _
      $region34: #{tpu_custom_call.1} parent=5 // pred_check_branch
        %259 = sbr.rel (%p256) target = $region36
      $region35: #{tpu_custom_call.1} parent=5 // pred_region
        %s260 = ssub.s32 %s20, 1
        %s261 = sand.u32 %s47, 1
        %s262 = scalar_lea.sflag [#allocation3], %s261
        %s263 = sand.u32 %s47, 1
        %s264 = smul.addr %s263, 32
        %s265 = scalar_lea.vmem [#allocation2], %s264
        // Predicated region
        $region37: #{tpu_custom_call.1} parent=35 // pred_check
          %p266 = pneg %p60
        $region38: #{tpu_custom_call.1} parent=35 // pred_check_branch
          %268 = sbr.rel (%p266) target = $region40
        $region39: #{tpu_custom_call.1} parent=35 // pred_region
          %270 = dma.done %s262, 512
        $region40: #{tpu_custom_call.1} parent=35 // pred_fallthru
          _
        %s271 = sand.u32 %s25, 1
        %s272 = scalar_lea.sflag [#allocation6], %s271
        %s273 = sand.u32 %s77, 1
        %s274 = smul.addr %s273, 32
        %s275 = scalar_lea.vmem [#allocation5], %s274
        // Predicated region
        $region41: #{tpu_custom_call.1} parent=35 // pred_check
          %p276 = pneg %p90
        $region42: #{tpu_custom_call.1} parent=35 // pred_check_branch
          %278 = sbr.rel (%p276) target = $region44
        $region43: #{tpu_custom_call.1} parent=35 // pred_region
          %280 = dma.done %s272, 512
        $region44: #{tpu_custom_call.1} parent=35 // pred_fallthru
          _
        // Predicated region
        $region45: #{tpu_custom_call.1} parent=35 // pred_check
          %p281 = pneg %p111
        $region46: #{tpu_custom_call.1} parent=35 // pred_check_branch
          %283 = sbr.rel (%p281) target = $region48
        $region47: #{tpu_custom_call.1} parent=35 // pred_region
          %285 = dma.done [#allocation6], 2304
        $region48: #{tpu_custom_call.1} parent=35 // pred_fallthru
          _
        // Predicated region
        $region49: #{tpu_custom_call.1} parent=35 // pred_check
          %p286 = pneg %p132
        $region50: #{tpu_custom_call.1} parent=35 // pred_check_branch
          %288 = sbr.rel (%p286) target = $region52
        $region51: #{tpu_custom_call.1} parent=35 // pred_region
          %290 = dma.done [#allocation9], 256
        $region52: #{tpu_custom_call.1} parent=35 // pred_fallthru
          _
        %s291 = sand.u32 %s47, 1
        %s292 = scalar_lea.sflag [#allocation3], %s291
        %s293 = sand.u32 %s47, 1
        %s294 = smul.addr %s293, 32
        %s295 = scalar_lea.vmem [#allocation2], %s294
        %p296 = pneg %p60
        %p297 = pneg %p57
        %s298 = sand.u32 %s25, 1
        %s299 = scalar_lea.sflag [#allocation6], %s298
        %s300 = sand.u32 %s77, 1
        %s301 = smul.addr %s300, 32
        %s302 = scalar_lea.vmem [#allocation5], %s301
        %p303 = pneg %p90
        %p304 = pneg %p87
        %p305 = pneg %p111
        %p306 = pneg %p108
        %p307 = pneg %p132
        %p308 = pneg %p129
        %p309 = pneg %p160
        %p310 = pneg %p157
        %s311 = sand.u32 %s147, 1
        %s312 = scalar_lea.sflag [#allocation4], %s311
        %s313 = sand.u32 %s147, 1
        %s314 = smul.addr %s313, 16
        %s315 = scalar_lea.vmem [#allocation10], %s314
        %s316 = sadd.s32 %s30, 1
        %v317 = vld [vmem:[%s265] sm:$0xff]
        %v318 = vld [vmem:[%s265 + $0x8] sm:$0xff]
        %v319 = vld [vmem:[%s265 + $0x10] sm:$0xff]
        %v320 = vld [vmem:[%s265 + $0x18] sm:$0xff]
        %v321 = vld [vmem:[%s275] sm:$0xff]
        %v322 = vld [vmem:[%s275 + $0x8] sm:$0xff]
        %v323 = vld [vmem:[%s275 + $0x10] sm:$0xff]
        %v324 = vld [vmem:[%s275 + $0x18] sm:$0xff]
        %333 = vrot.lane.b32.xlu0 %v317, 127
        %v334 = vpop.permute.xlu0 %333
        %335 = vrot.lane.b32.xlu0 %v321, 127
        %v336 = vpop.permute.xlu0 %335
        %337 = vrot.lane.b32.xlu0 %v318, 127
        %v338 = vpop.permute.xlu0 %337
        %339 = vrot.lane.b32.xlu0 %v322, 127
        %v340 = vpop.permute.xlu0 %339
        %341 = vrot.lane.b32.xlu0 %v319, 127
        %v342 = vpop.permute.xlu0 %341
        %343 = vrot.lane.b32.xlu0 %v323, 127
        %v344 = vpop.permute.xlu0 %343
        %345 = vrot.lane.b32.xlu0 %v320, 127
        %v346 = vpop.permute.xlu0 %345
        %347 = vrot.lane.b32.xlu0 %v324, 127
        %v348 = vpop.permute.xlu0 %347
        %vm349 = vcmask 1039360
        %v350 = vsel %vm349, %v334, %v336
        %v351 = vsel %vm349, %v338, %v340
        %v352 = vsel %vm349, %v342, %v344
        %v353 = vsel %vm349, %v346, %v348
        %358 = vrot.lane.b32.xlu0 %v317, 126
        %v359 = vpop.permute.xlu0 %358
        %360 = vrot.lane.b32.xlu0 %v321, 126
        %v361 = vpop.permute.xlu0 %360
        %362 = vrot.lane.b32.xlu0 %v318, 126
        %v363 = vpop.permute.xlu0 %362
        %364 = vrot.lane.b32.xlu0 %v322, 126
        %v365 = vpop.permute.xlu0 %364
        %366 = vrot.lane.b32.xlu0 %v319, 126
        %v367 = vpop.permute.xlu0 %366
        %368 = vrot.lane.b32.xlu0 %v323, 126
        %v369 = vpop.permute.xlu0 %368
        %370 = vrot.lane.b32.xlu0 %v320, 126
        %v371 = vpop.permute.xlu0 %370
        %372 = vrot.lane.b32.xlu0 %v324, 126
        %v373 = vpop.permute.xlu0 %372
        %vm374 = vcmask 1031168
        %v375 = vsel %vm374, %v359, %v361
        %v376 = vsel %vm374, %v363, %v365
        %v377 = vsel %vm374, %v367, %v369
        %v378 = vsel %vm374, %v371, %v373
        %383 = vrot.lane.b32.xlu0 %v317, 125
        %v384 = vpop.permute.xlu0 %383
        %385 = vrot.lane.b32.xlu0 %v321, 125
        %v386 = vpop.permute.xlu0 %385
        %387 = vrot.lane.b32.xlu0 %v318, 125
        %v388 = vpop.permute.xlu0 %387
        %389 = vrot.lane.b32.xlu0 %v322, 125
        %v390 = vpop.permute.xlu0 %389
        %391 = vrot.lane.b32.xlu0 %v319, 125
        %v392 = vpop.permute.xlu0 %391
        %393 = vrot.lane.b32.xlu0 %v323, 125
        %v394 = vpop.permute.xlu0 %393
        %395 = vrot.lane.b32.xlu0 %v320, 125
        %v396 = vpop.permute.xlu0 %395
        %397 = vrot.lane.b32.xlu0 %v324, 125
        %v398 = vpop.permute.xlu0 %397
        %vm399 = vcmask 1022976
        %v400 = vsel %vm399, %v384, %v386
        %v401 = vsel %vm399, %v388, %v390
        %v402 = vsel %vm399, %v392, %v394
        %v403 = vsel %vm399, %v396, %v398
        %v408 = vld [vmem:[#allocation7] sm:$0xff]
        %v409 = vld [vmem:[#allocation7 + $0x8] sm:$0xff]
        %v410 = vld [vmem:[#allocation7 + $0x10] sm:$0xff]
        %v411 = vld [vmem:[#allocation7 + $0x18] sm:$0xff]
        %v412 = vld [vmem:[#allocation7 + $0x20] sm:$0xff]
        %v413 = vld [vmem:[#allocation7 + $0x28] sm:$0xff]
        %v414 = vld [vmem:[#allocation7 + $0x30] sm:$0xff]
        %v415 = vld [vmem:[#allocation7 + $0x38] sm:$0xff]
        %v416 = vld [vmem:[#allocation7 + $0x40] sm:$0xff]
        %v417 = vld [vmem:[#allocation7 + $0x48] sm:$0xff]
        %v418 = vld [vmem:[#allocation7 + $0x50] sm:$0xff]
        %v419 = vld [vmem:[#allocation7 + $0x58] sm:$0xff]
        %v420 = vld [vmem:[#allocation7 + $0x60] sm:$0xff]
        %v421 = vld [vmem:[#allocation7 + $0x68] sm:$0xff]
        %v422 = vld [vmem:[#allocation7 + $0x70] sm:$0xff]
        %v423 = vld [vmem:[#allocation7 + $0x78] sm:$0xff]
        %v424 = vld [vmem:[#allocation7 + $0x80] sm:$0xff]
        %v425 = vld [vmem:[#allocation7 + $0x88] sm:$0xff]
        %426 = vmatpush.msra.mxu0 %v403
        %427 = vmatpush.msra.mxu0 %v402
        %428 = vmatpush.msra.mxu0 %v401
        %429 = vmatpush.msra.mxu0 %v400
        %430 = vmatpush.msra.mxu0 %v378
        %431 = vmatpush.msra.mxu0 %v377
        %432 = vmatpush.msra.mxu0 %v376
        %433 = vmatpush.msra.mxu0 %v375
        %434 = vmatpush.msra.mxu0 %v353
        %435 = vmatpush.msra.mxu0 %v352
        %436 = vmatpush.msra.mxu0 %v351
        %437 = vmatpush.msra.mxu0 %v350
        %438 = vmatpush.msra.mxu0 %v320
        %439 = vmatpush.msra.mxu0 %v319
        %440 = vmatpush.msra.mxu0 %v318
        %441 = vmatpush.msra.mxu0 %v317
        %442 = vmatmul.f32.gmra.mxu0 %v408
        %v443 = vpop.f32.mrf.mxu0
        %v444 = vadd.f32 0.0, %v443
        %445 = vmatmul.f32.gmra.mxu0 %v409
        %v446 = vpop.f32.mrf.mxu0
        %v447 = vadd.f32 0.0, %v446
        %448 = vmatmul.f32.gmra.mxu0 %v410
        %v449 = vpop.f32.mrf.mxu0
        %v450 = vadd.f32 0.0, %v449
        %451 = vmatmul.f32.gmra.mxu0 %v411
        %v452 = vpop.f32.mrf.mxu0
        %v453 = vadd.f32 0.0, %v452
        %454 = vmatmul.f32.gmra.mxu0 %v412
        %v455 = vpop.f32.mrf.mxu0
        %v456 = vadd.f32 0.0, %v455
        %457 = vmatmul.f32.gmra.mxu0 %v413
        %v458 = vpop.f32.mrf.mxu0
        %v459 = vadd.f32 0.0, %v458
        %460 = vmatmul.f32.gmra.mxu0 %v414
        %v461 = vpop.f32.mrf.mxu0
        %v462 = vadd.f32 0.0, %v461
        %463 = vmatmul.f32.gmra.mxu0 %v415
        %v464 = vpop.f32.mrf.mxu0
        %v465 = vadd.f32 0.0, %v464
        %466 = vmatmul.f32.gmra.mxu0 %v416
        %v467 = vpop.f32.mrf.mxu0
        %v468 = vadd.f32 0.0, %v467
        %469 = vmatmul.f32.gmra.mxu0 %v417
        %v470 = vpop.f32.mrf.mxu0
        %v471 = vadd.f32 0.0, %v470
        %472 = vmatmul.f32.gmra.mxu0 %v418
        %v473 = vpop.f32.mrf.mxu0
        %v474 = vadd.f32 0.0, %v473
        %475 = vmatmul.f32.gmra.mxu0 %v419
        %v476 = vpop.f32.mrf.mxu0
        %v477 = vadd.f32 0.0, %v476
        %478 = vmatmul.f32.gmra.mxu0 %v420
        %v479 = vpop.f32.mrf.mxu0
        %v480 = vadd.f32 0.0, %v479
        %481 = vmatmul.f32.gmra.mxu0 %v421
        %v482 = vpop.f32.mrf.mxu0
        %v483 = vadd.f32 0.0, %v482
        %484 = vmatmul.f32.gmra.mxu0 %v422
        %v485 = vpop.f32.mrf.mxu0
        %v486 = vadd.f32 0.0, %v485
        %487 = vmatmul.f32.gmra.mxu0 %v423
        %v488 = vpop.f32.mrf.mxu0
        %v489 = vadd.f32 0.0, %v488
        %490 = vmatmul.f32.gmra.mxu0 %v424
        %v491 = vpop.f32.mrf.mxu0
        %v492 = vadd.f32 0.0, %v491
        %493 = vmatmul.f32.gmra.mxu0 %v425
        %v494 = vpop.f32.mrf.mxu0
        %v495 = vadd.f32 0.0, %v494
        %496 = vdwg.mxu0
        %v497 = vmul.f32 %v444, %v444
        %v498 = vmul.f32 %v447, %v447
        %v499 = vmul.f32 %v450, %v450
        %v500 = vmul.f32 %v453, %v453
        %v501 = vmul.f32 %v456, %v456
        %v502 = vmul.f32 %v459, %v459
        %v503 = vmul.f32 %v462, %v462
        %v504 = vmul.f32 %v465, %v465
        %v505 = vmul.f32 %v468, %v468
        %v506 = vmul.f32 %v471, %v471
        %v507 = vmul.f32 %v474, %v474
        %v508 = vmul.f32 %v477, %v477
        %v509 = vmul.f32 %v480, %v480
        %v510 = vmul.f32 %v483, %v483
        %v511 = vmul.f32 %v486, %v486
        %v512 = vmul.f32 %v489, %v489
        %v513 = vmul.f32 %v492, %v492
        %v514 = vmul.f32 %v495, %v495
        %v515 = vadd.f32 %v497, %v506
        %v516 = vadd.f32 %v498, %v507
        %v517 = vadd.f32 %v499, %v508
        %v518 = vadd.f32 %v500, %v509
        %v519 = vadd.f32 %v501, %v510
        %v520 = vadd.f32 %v502, %v511
        %v521 = vadd.f32 %v503, %v512
        %v522 = vadd.f32 %v504, %v513
        %v523 = vadd.f32 %v505, %v514
        %v524 = vrsqrt.pop %v515
        %v525 = vmul.f32 %v524, %v515
        %v526 = vmul.f32 %v525, %v524
        %v527 = vmul.f32 0.5, %v526
        %v528 = vsub.f32 1.5, %v527
        %v529 = vmul.f32 %v524, %v528
        %v530 = vmul.f32 %v515, %v529
        %vm531 = vcmp.eq.f32.partialorder %v515, inf
        %v532 = vsel %vm531, %v515, %v530
        %vm533 = vcmp.eq.f32.partialorder %v515, 0.0
        %v534 = vand.u32 %v515, 2147483648
        %v535 = vsel %vm533, %v534, %v532
        %v536 = vrsqrt.pop %v516
        %v537 = vmul.f32 %v536, %v516
        %v538 = vmul.f32 %v537, %v536
        %v539 = vmul.f32 0.5, %v538
        %v540 = vsub.f32 1.5, %v539
        %v541 = vmul.f32 %v536, %v540
        %v542 = vmul.f32 %v516, %v541
        %vm543 = vcmp.eq.f32.partialorder %v516, inf
        %v544 = vsel %vm543, %v516, %v542
        %vm545 = vcmp.eq.f32.partialorder %v516, 0.0
        %v546 = vand.u32 %v516, 2147483648
        %v547 = vsel %vm545, %v546, %v544
        %v548 = vrsqrt.pop %v517
        %v549 = vmul.f32 %v548, %v517
        %v550 = vmul.f32 %v549, %v548
        %v551 = vmul.f32 0.5, %v550
        %v552 = vsub.f32 1.5, %v551
        %v553 = vmul.f32 %v548, %v552
        %v554 = vmul.f32 %v517, %v553
        %vm555 = vcmp.eq.f32.partialorder %v517, inf
        %v556 = vsel %vm555, %v517, %v554
        %vm557 = vcmp.eq.f32.partialorder %v517, 0.0
        %v558 = vand.u32 %v517, 2147483648
        %v559 = vsel %vm557, %v558, %v556
        %v560 = vrsqrt.pop %v518
        %v561 = vmul.f32 %v560, %v518
        %v562 = vmul.f32 %v561, %v560
        %v563 = vmul.f32 0.5, %v562
        %v564 = vsub.f32 1.5, %v563
        %v565 = vmul.f32 %v560, %v564
        %v566 = vmul.f32 %v518, %v565
        %vm567 = vcmp.eq.f32.partialorder %v518, inf
        %v568 = vsel %vm567, %v518, %v566
        %vm569 = vcmp.eq.f32.partialorder %v518, 0.0
        %v570 = vand.u32 %v518, 2147483648
        %v571 = vsel %vm569, %v570, %v568
        %v572 = vrsqrt.pop %v519
        %v573 = vmul.f32 %v572, %v519
        %v574 = vmul.f32 %v573, %v572
        %v575 = vmul.f32 0.5, %v574
        %v576 = vsub.f32 1.5, %v575
        %v577 = vmul.f32 %v572, %v576
        %v578 = vmul.f32 %v519, %v577
        %vm579 = vcmp.eq.f32.partialorder %v519, inf
        %v580 = vsel %vm579, %v519, %v578
        %vm581 = vcmp.eq.f32.partialorder %v519, 0.0
        %v582 = vand.u32 %v519, 2147483648
        %v583 = vsel %vm581, %v582, %v580
        %v584 = vrsqrt.pop %v520
        %v585 = vmul.f32 %v584, %v520
        %v586 = vmul.f32 %v585, %v584
        %v587 = vmul.f32 0.5, %v586
        %v588 = vsub.f32 1.5, %v587
        %v589 = vmul.f32 %v584, %v588
        %v590 = vmul.f32 %v520, %v589
        %vm591 = vcmp.eq.f32.partialorder %v520, inf
        %v592 = vsel %vm591, %v520, %v590
        %vm593 = vcmp.eq.f32.partialorder %v520, 0.0
        %v594 = vand.u32 %v520, 2147483648
        %v595 = vsel %vm593, %v594, %v592
        %v596 = vrsqrt.pop %v521
        %v597 = vmul.f32 %v596, %v521
        %v598 = vmul.f32 %v597, %v596
        %v599 = vmul.f32 0.5, %v598
        %v600 = vsub.f32 1.5, %v599
        %v601 = vmul.f32 %v596, %v600
        %v602 = vmul.f32 %v521, %v601
        %vm603 = vcmp.eq.f32.partialorder %v521, inf
        %v604 = vsel %vm603, %v521, %v602
        %vm605 = vcmp.eq.f32.partialorder %v521, 0.0
        %v606 = vand.u32 %v521, 2147483648
        %v607 = vsel %vm605, %v606, %v604
        %v608 = vrsqrt.pop %v522
        %v609 = vmul.f32 %v608, %v522
        %v610 = vmul.f32 %v609, %v608
        %v611 = vmul.f32 0.5, %v610
        %v612 = vsub.f32 1.5, %v611
        %v613 = vmul.f32 %v608, %v612
        %v614 = vmul.f32 %v522, %v613
        %vm615 = vcmp.eq.f32.partialorder %v522, inf
        %v616 = vsel %vm615, %v522, %v614
        %vm617 = vcmp.eq.f32.partialorder %v522, 0.0
        %v618 = vand.u32 %v522, 2147483648
        %v619 = vsel %vm617, %v618, %v616
        %v620 = vrsqrt.pop %v523
        %v621 = vmul.f32 %v620, %v523
        %v622 = vmul.f32 %v621, %v620
        %v623 = vmul.f32 0.5, %v622
        %v624 = vsub.f32 1.5, %v623
        %v625 = vmul.f32 %v620, %v624
        %v626 = vmul.f32 %v523, %v625
        %vm627 = vcmp.eq.f32.partialorder %v523, inf
        %v628 = vsel %vm627, %v523, %v626
        %vm629 = vcmp.eq.f32.partialorder %v523, 0.0
        %v630 = vand.u32 %v523, 2147483648
        %v631 = vsel %vm629, %v630, %v628
        %v632 = vld [vmem:[#allocation8] sm:$0xff]
        %v633 = vld [vmem:[#allocation8 + $0x8] sm:$0xff]
        %vm634 = vcmask 588800
        %v636 = vsel %vm634, %v632, 0
        %v639 = vsel %vm634, %v633, 0
        %641 = vmatpush.msra.mxu0 0.0
        %642 = vmatpush.msra.mxu0 0.0
        %643 = vmatpush.msra.mxu0 0.0
        %644 = vmatpush.msra.mxu0 0.0
        %645 = vmatpush.msra.mxu0 0.0
        %646 = vmatpush.msra.mxu0 0.0
        %647 = vmatpush.msra.mxu0 0.0
        %648 = vmatpush.msra.mxu0 %v631
        %649 = vmatpush.msra.mxu0 %v619
        %650 = vmatpush.msra.mxu0 %v607
        %651 = vmatpush.msra.mxu0 %v595
        %652 = vmatpush.msra.mxu0 %v583
        %653 = vmatpush.msra.mxu0 %v571
        %654 = vmatpush.msra.mxu0 %v559
        %655 = vmatpush.msra.mxu0 %v547
        %656 = vmatpush.msra.mxu0 %v535
        %657 = vmatmul.f32.gmra.mxu0 %v636
        %v658 = vpop.f32.mrf.mxu0
        %v659 = vadd.f32 0.0, %v658
        %660 = vmatmul.f32.gmra.mxu0 %v639
        %v661 = vpop.f32.mrf.mxu0
        %v662 = vadd.f32 0.0, %v661
        %663 = vdwg.mxu0
        %664 = vst [vmem:[%s315] sm:$0xff] %v659
        %665 = vst [vmem:[%s315 + $0x8] sm:$0xff] %v662
        %s666 = sand.u32 %s147, 1
        %s667 = scalar_lea.sflag [#allocation4], %s666
        %s668 = sand.u32 %s147, 1
        %s669 = smul.addr %s668, 16
        %s670 = scalar_lea.vmem [#allocation10], %s669
        // Predicated region
        $region53: #{tpu_custom_call.1} parent=35 // pred_check
          %p671 = pneg %p157
        $region54: #{tpu_custom_call.1} parent=35 // pred_check_branch
          %673 = sbr.rel (%p671) target = $region56
        $region55: #{tpu_custom_call.1} parent=35 // pred_region
          %675 = vsyncadd %s667, 0
          %s676 = smul.addr %s29, 2
          %s677 = sadd.s32 %s30, %s676
          %s678 = smul.addr %s677, 8
          %s679 = scalar_lea.hbm %s4, %s678
          %s680 = sshll.u32 %s670, 4
          %s681 = int_to_ptr.vmem [resolvable:$true] %s680
          %s682 = sshll.u32 %s679, 4
          %s683 = int_to_ptr.hbm [resolvable:$true] %s682
          %688 = dma.vmem_to_hbm [thread:$0]  %s681, 256, %s683, %s667, 128, 128, 8
        $region56: #{tpu_custom_call.1} parent=35 // pred_fallthru
          _
      $region36: #{tpu_custom_call.1} parent=5 // pred_fallthru
        _
      %p689 = scmp.le.s32.totalorder 2, %s20
      // Predicated region
      $region57: #{tpu_custom_call.1} parent=5 // pred_check
        %p690 = pneg %p689
      $region58: #{tpu_custom_call.1} parent=5 // pred_check_branch
        %692 = sbr.rel (%p690) target = $region60
      $region59: #{tpu_custom_call.1} parent=5 // pred_region
        %s693 = ssub.s32 %s20, 2
        // Predicated region
        $region61: #{tpu_custom_call.1} parent=59 // pred_check
          %p694 = pneg %p163
        $region62: #{tpu_custom_call.1} parent=59 // pred_check_branch
          %696 = sbr.rel (%p694) target = $region64
        $region63: #{tpu_custom_call.1} parent=59 // pred_region
          %s697 = sand.u32 %s148, 1
          %s698 = scalar_lea.sflag [#allocation4], %s697
          %s699 = sand.u32 %s148, 1
          %s700 = smul.addr %s699, 16
          %s701 = scalar_lea.vmem [#allocation10], %s700
          %703 = dma.done %s698, 256
        $region64: #{tpu_custom_call.1} parent=59 // pred_fallthru
          _
      $region60: #{tpu_custom_call.1} parent=5 // pred_fallthru
        _
    $region6: #{tpu_custom_call.1} parent=1 // loop_footer
      %s24 = sadd.s32 1, %s20
    $region7: #{tpu_custom_call.1} parent=1 // loop_footer_branch
      %19 = sbr.rel target = $region3
    $region8: #{tpu_custom_call.1} parent=1 // loop_exit
      _
    %704 = vsyncpa [#allocation3], 1
    %s705 = scalar_lea.sflag [#allocation3], 1
    %706 = vsyncpa %s705, 1
    %707 = vsyncpa [#allocation6], 1
    %s708 = scalar_lea.sflag [#allocation6], 1
    %709 = vsyncpa %s708, 1
    %710 = vsyncpa [#allocation9], 1
    %711 = vsyncpa [#allocation4], 1
    %s712 = scalar_lea.sflag [#allocation4], 1
    %713 = vsyncpa %s712, 1

</llo_original>
